<compile_context>
chip_gen: v5e
topology: v5e:2x2
jax: 0.10.0
libtpu: 0.0.40
codegen_flags: <defaults>
</compile_context>

<pallas_src>
import math
import numpy as np
import jax
import jax.numpy as jnp
from jax.experimental import pallas as pl
from jax.experimental.pallas import tpu as pltpu

# ----- small model config (consistent with the module; scaled down) -----
B = 8            # samples per forward pass == attention sequence length
G = 16           # num_genes
D = 32           # d_model
H = 4            # nhead
HD = D // H      # head dim
F = 64           # dim_feedforward
L = 2            # num_encoder_layers
LN_EPS = 1e-5
PW = 128         # packed-parameter lane width (one full lane tile)

assert D % H == 0
assert max(G, D, 3 * D, F, 16) <= PW


# ---------------------------------------------------------------- packing ----
def _layout_w(entries):
    """bf16 weight slab layout: every entry starts on a 16-row (bf16 tile) boundary."""
    off, r = {}, 0
    for name, nrows in entries:
        assert r % 16 == 0, f"bf16 slab entry {name} not 16-row aligned"
        assert nrows % 8 == 0
        off[name] = (r, nrows)
        r += ((nrows + 15) // 16) * 16
    total = ((r + 15) // 16) * 16
    return off, total


def _layout_v(names):
    """f32 bias/LN slab layout: one row of data per entry, 8-row aligned slots."""
    off = {}
    for i, name in enumerate(names):
        off[name] = i * 8
        assert off[name] % 8 == 0
    return off, max(len(names) * 8, 8)


# Weight entries: (name, stored/loaded rows). Entries whose matmul LHS is the
# lane-padded [B,128] activation store 128 (zero-padded) contraction rows.
_W_ENTRIES = [("win", 16), ("wcx", 128)] + sum(
    [[(f"wqkv{l}", 128), (f"wo{l}", 32), (f"w1{l}", 128), (f"w2{l}", 128)]
     for l in range(L)], [])
W_OFF, W_ROWS = _layout_w(_W_ENTRIES)

_V_NAMES = ["bin", "lnfg", "lnfb", "wcu", "bc", "wout", "bout"] + sum(
    [[f"bqkv{l}", f"bo{l}", f"ln1g{l}", f"ln1b{l}",
      f"b1{l}", f"b2{l}", f"ln2g{l}", f"ln2b{l}"] for l in range(L)], [])
V_OFF, V_ROWS = _layout_v(_V_NAMES)


def pack_params(params):
    """Pack all parameters into one bf16 weight slab + one f32 bias/LN slab."""
    wbuf = np.zeros((W_ROWS, PW), np.float32)
    vbuf = np.zeros((V_ROWS, PW), np.float32)

    def put_w(name, arr):
        r0, nrows = W_OFF[name]
        a = np.asarray(arr, np.float32)
        assert a.shape[0] <= nrows and a.shape[1] <= PW, name
        wbuf[r0:r0 + a.shape[0], :a.shape[1]] = a

    def put_v(name, arr):
        r0 = V_OFF[name]
        a = np.asarray(arr, np.float32).reshape(1, -1)
        assert a.shape[1] <= PW, name
        vbuf[r0, :a.shape[1]] = a[0]

    put_w("win", params["win"])
    put_w("wcx", params["wcx"])
    put_v("bin", params["bin"])
    put_v("lnfg", params["lnfg"])
    put_v("lnfb", params["lnfb"])
    put_v("wcu", params["wcu"])
    put_v("bc", params["bc"])
    put_v("wout", params["wout"])      # (16,1) -> stored as a row
    put_v("bout", params["bout"])
    for l in range(L):
        wqkv = np.concatenate([np.asarray(params["wq"][l]),
                               np.asarray(params["wk"][l]),
                               np.asarray(params["wv"][l])], axis=1)
        bqkv = np.concatenate([np.asarray(params["bq"][l]),
                               np.asarray(params["bk"][l]),
                               np.asarray(params["bv"][l])], axis=1)
        put_w(f"wqkv{l}", wqkv)
        put_w(f"wo{l}", params["wo"][l])
        put_w(f"w1{l}", params["w1"][l])
        put_w(f"w2{l}", params["w2"][l])
        put_v(f"bqkv{l}", bqkv)
        put_v(f"bo{l}", params["bo"][l])
        put_v(f"ln1g{l}", params["ln1g"][l])
        put_v(f"ln1b{l}", params["ln1b"][l])
        put_v(f"b1{l}", params["b1"][l])
        put_v(f"b2{l}", params["b2"][l])
        put_v(f"ln2g{l}", params["ln2g"][l])
        put_v(f"ln2b{l}", params["ln2b"][l])
    return jnp.asarray(wbuf, jnp.bfloat16), jnp.asarray(vbuf, jnp.float32)


# ----------------------------------------------------------------- kernel ----
def _layer_norm_padded(v, g, b):
    """LayerNorm over D valid lanes of a [B,128] lane-padded array.

    v has exact zeros in lanes [D,128); g/b rows are zero-padded there too, so
    the padding lanes stay exactly zero after the normalization."""
    inv_d = 1.0 / D
    mu = jnp.sum(v, axis=-1, keepdims=True) * inv_d
    ms = jnp.sum(v * v, axis=-1, keepdims=True) * inv_d
    var = ms - mu * mu
    return (v - mu) * jax.lax.rsqrt(var + LN_EPS) * g + b


def updrs_kernel(x_ref, u_ref, wp_ref, vp_ref, out_ref):
    f32 = jnp.float32
    bf16 = jnp.bfloat16

    def W(name):                                  # bf16 weight tile, full 128 lanes
        r0, nr = W_OFF[name]
        return wp_ref[pl.ds(r0, nr), :]

    def V(name):                                  # f32 bias/LN row, 8-row aligned
        r0 = V_OFF[name]
        return vp_ref[pl.ds(r0, 1), :]

    x = x_ref[...].astype(bf16)                   # [B, G]
    u = u_ref[...]                                # [B, 1] f32

    # input_layer + ReLU -> lane-padded [B,128] (padding lanes exactly 0)
    h = jnp.dot(x, W("win"), preferred_element_type=f32) + V("bin")
    h = jnp.maximum(h, 0.0)

    scale = 1.0 / math.sqrt(HD)

    # transformer encoder (post-norm layers, relu FFN), statically unrolled
    for l in range(L):
        # fused Q/K/V projection: one matmul + one bias add (valid lanes [0,3D))
        qkv = (jnp.dot(h.astype(bf16), W(f"wqkv{l}"), preferred_element_type=f32)
               + V(f"bqkv{l}"))                   # [B, 128] f32

        # hoisted K transpose: one XLU transpose per layer, per-head sublane slices
        kT = qkv[:, D:2 * D].T                    # [D, B]
        wo = W(f"wo{l}")                          # [D, 128] bf16 (valid lanes [0,D))

        # per-head softmax(QK^T)V with Wo distributed per head (no lane concat)
        acc = None
        for hi in range(H):
            qh = qkv[:, hi * HD:(hi + 1) * HD]                     # [B, HD]
            vh = qkv[:, 2 * D + hi * HD:2 * D + (hi + 1) * HD]     # [B, HD]
            kTh = kT[hi * HD:(hi + 1) * HD, :]                     # [HD, B]
            s = jnp.dot(qh, kTh, preferred_element_type=f32) * scale   # [B, B]
            s = s - jnp.max(s, axis=-1, keepdims=True)
            e = jnp.exp(s)
            p = e * pl.reciprocal(jnp.sum(e, axis=-1, keepdims=True), approx=True)
            pv = jnp.dot(p, vh, preferred_element_type=f32)        # [B, HD]
            contrib = jnp.dot(pv.astype(bf16), wo[hi * HD:(hi + 1) * HD, :],
                              preferred_element_type=f32)          # [B, 128]
            acc = contrib if acc is None else acc + contrib
        attn = acc + V(f"bo{l}")

        h = _layer_norm_padded(h + attn, V(f"ln1g{l}"), V(f"ln1b{l}"))

        ff = (jnp.dot(h.astype(bf16), W(f"w1{l}"), preferred_element_type=f32)
              + V(f"b1{l}"))
        ff = jnp.maximum(ff, 0.0)
        ff = (jnp.dot(ff.astype(bf16), W(f"w2{l}"), preferred_element_type=f32)
              + V(f"b2{l}"))

        h = _layer_norm_padded(h + ff, V(f"ln2g{l}"), V(f"ln2b{l}"))

    # final encoder LayerNorm (nn.Transformer adds one after the layer stack)
    h = _layer_norm_padded(h, V("lnfg"), V("lnfb"))

    # combined_layer on concat([h, updrs]) == h @ Wc_x + u * wcu_row (VPU bcast)
    c = (jnp.dot(h.astype(bf16), W("wcx"), preferred_element_type=f32)
         + u * V("wcu") + V("bc"))
    c = jnp.maximum(c, 0.0)                       # [B, 128], valid lanes [0,16)

    # output_layer: lane reduction against the stored wout row + scalar bias
    out = jnp.sum(c * V("wout"), axis=-1, keepdims=True) + V("bout")[:, 0:1]
    out_ref[...] = out.astype(out_ref.dtype)      # [B, 1]


# ---------------------------------------------------------------- wrapper ----
def updrs_forward(expression_data, current_updrs, time_periods, packed):
    """Run NSEQ independent forward passes (each one coupled B-sample sequence).

    expression_data: [NSEQ, B, G] or [B, G]; current_updrs: [NSEQ, B] or [B].
    time_periods is unused by the reference forward pass."""
    del time_periods
    wbuf, vbuf = packed

    x = jnp.asarray(expression_data, jnp.float32)
    u = jnp.asarray(current_updrs, jnp.float32)
    squeeze = False
    if x.ndim == 2:
        x, u, squeeze = x[None], u[None], True
    nseq, b, g = x.shape
    u = u.reshape(nseq, b, 1)

    out = pl.pallas_call(
        updrs_kernel,
        out_shape=jax.ShapeDtypeStruct((nseq, b, 1), jnp.float32),
        grid_spec=pltpu.PrefetchScalarGridSpec(
            num_scalar_prefetch=0,
            grid=(nseq,),
            in_specs=[
                # per-sequence inputs walk the grid axis
                pl.BlockSpec((None, b, g), lambda i: (i, 0, 0)),
                pl.BlockSpec((None, b, 1), lambda i: (i, 0, 0)),
                # parameter slabs: constant block index -> DMA'd once, VMEM-resident
                pl.BlockSpec((W_ROWS, PW), lambda i: (0, 0)),
                pl.BlockSpec((V_ROWS, PW), lambda i: (0, 0)),
            ],
            out_specs=pl.BlockSpec((None, b, 1), lambda i: (i, 0, 0)),
        ),
        compiler_params=pltpu.CompilerParams(
            dimension_semantics=("parallel",)),   # v7x: shard sequences over 2 TCs
    )(x, u, wbuf, vbuf)

    out = out[..., 0]                             # [NSEQ, B]
    return out[0] if squeeze else out


# ------------------------------------------------------------- parameters ----
def make_params(key):
    """Deterministic synthetic parameters (shapes follow the nn.Module)."""
    ks = list(jax.random.split(key, 32))
    nrm = lambda k, shp, s=0.05: (s * jax.random.normal(k, shp)).astype(jnp.float32)
    zeros = lambda shp: jnp.zeros(shp, jnp.float32)
    ones = lambda shp: jnp.ones(shp, jnp.float32)
    return dict(
        win=nrm(ks[0], (G, D)),   bin=zeros((1, D)),
        wq=nrm(ks[1], (L, D, D)), bq=zeros((L, 1, D)),
        wk=nrm(ks[2], (L, D, D)), bk=zeros((L, 1, D)),
        wv=nrm(ks[3], (L, D, D)), bv=zeros((L, 1, D)),
        wo=nrm(ks[4], (L, D, D)), bo=zeros((L, 1, D)),
        ln1g=ones((L, 1, D)),     ln1b=zeros((L, 1, D)),
        w1=nrm(ks[5], (L, D, F)), b1=zeros((L, 1, F)),
        w2=nrm(ks[6], (L, F, D)), b2=zeros((L, 1, D)),
        ln2g=ones((L, 1, D)),     ln2b=zeros((L, 1, D)),
        lnfg=ones((1, D)),        lnfb=zeros((1, D)),
        wcx=nrm(ks[7], (D, 16)),  wcu=nrm(ks[8], (1, 16)),  bc=zeros((1, 16)),
        wout=nrm(ks[9], (16, 1)), bout=zeros((1, 1)),
    )


def _layer_norm_ref(v, g, b):
    mu = jnp.mean(v, axis=-1, keepdims=True)
    var = jnp.mean(v * v, axis=-1, keepdims=True) - mu * mu
    return (v - mu) * jax.lax.rsqrt(var + LN_EPS) * g + b


def updrs_forward_ref(expression_data, current_updrs, params):
    """Pure-JAX f32 reference mirroring the PyTorch forward (eval mode)."""
    p = params
    x = jnp.maximum(expression_data @ p["win"] + p["bin"], 0.0)
    scale = 1.0 / math.sqrt(HD)
    h = x
    for l in range(L):
        q = h @ p["wq"][l] + p["bq"][l]
        k = h @ p["wk"][l] + p["bk"][l]
        v = h @ p["wv"][l] + p["bv"][l]
        heads = []
        for hi in range(H):
            sl = slice(hi * HD, (hi + 1) * HD)
            s = (q[:, sl] @ k[:, sl].T) * scale
            pr = jax.nn.softmax(s, axis=-1)
            heads.append(pr @ v[:, sl])
        attn = jnp.concatenate(heads, axis=-1) @ p["wo"][l] + p["bo"][l]
        h = _layer_norm_ref(h + attn, p["ln1g"][l], p["ln1b"][l])
        ff = jnp.maximum(h @ p["w1"][l] + p["b1"][l], 0.0) @ p["w2"][l] + p["b2"][l]
        h = _layer_norm_ref(h + ff, p["ln2g"][l], p["ln2b"][l])
    h = _layer_norm_ref(h, p["lnfg"], p["lnfb"])
    c = jnp.concatenate([h, current_updrs[:, None]], axis=1)
    wc = jnp.concatenate([p["wcx"], p["wcu"]], axis=0)
    c = jnp.maximum(c @ wc + p["bc"], 0.0)
    return (c @ p["wout"] + p["bout"])[:, 0]


if __name__ == "__main__":
    key = jax.random.PRNGKey(0)
    k_x, k_u, k_t, k_p = jax.random.split(key, 4)

    NSEQ = 4   # independent forward passes -> grid axis (sharded on v7x megacore)
    expression_data = jax.random.normal(k_x, (NSEQ, B, G), dtype=jnp.float32)
    current_updrs = jax.random.uniform(k_u, (NSEQ, B), dtype=jnp.float32) * 50.0
    time_periods = jax.random.uniform(k_t, (NSEQ, B), dtype=jnp.float32)  # unused

    params = make_params(k_p)
    packed = pack_params(params)

    out = updrs_forward(expression_data, current_updrs, time_periods, packed)
    out = jax.block_until_ready(out)
    assert out.shape == (NSEQ, B)

    ref = jax.vmap(lambda xx, uu: updrs_forward_ref(xx, uu, params))(
        expression_data, current_updrs)
    np.testing.assert_allclose(np.asarray(out), np.asarray(ref), rtol=5e-2, atol=1e-1)
    print("KERNEL_OK")
</pallas_src>

<mosaic_0001>
module attributes {stable_mosaic.version = 11 : i64} {
  func.func @updrs_kernel(%arg0: i32, %arg1: memref<1x8x16xf32, #tpu.memory_space<vmem>>, %arg2: memref<1x8x1xf32, #tpu.memory_space<vmem>>, %arg3: memref<976x128xbf16, #tpu.memory_space<vmem>>, %arg4: memref<184x128xf32, #tpu.memory_space<vmem>>, %arg5: memref<1x8x1xf32, #tpu.memory_space<vmem>>) attributes {dimension_semantics = [#tpu.dimension_semantics<parallel>], iteration_bounds = array<i64: 4>, scalar_prefetch = 0 : i64, scratch_operands = 0 : i64, tpu.core_type = #tpu.core_type<tc>, window_params = [{transform_indices = @transform_0, window_bounds = array<i64: 1, 8, 16>}, {transform_indices = @transform_1, window_bounds = array<i64: 1, 8, 1>}, {pipeline_mode = #tpu.pipeline_mode<synchronous>, transform_indices = @transform_2, window_bounds = array<i64: 976, 128>}, {pipeline_mode = #tpu.pipeline_mode<synchronous>, transform_indices = @transform_3, window_bounds = array<i64: 184, 128>}, {transform_indices = @transform_4, window_bounds = array<i64: 1, 8, 1>}]} {
    %c0 = arith.constant 0 : index
    %c0_0 = arith.constant 0 : index
    %c0_1 = arith.constant 0 : index
    %0 = vector.load %arg1[%c0, %c0_0, %c0_1] : memref<1x8x16xf32, #tpu.memory_space<vmem>>, vector<1x8x16xf32>
    %1 = vector.shape_cast %0 : vector<1x8x16xf32> to vector<8x16xf32>
    %2 = arith.truncf %1 : vector<8x16xf32> to vector<8x16xbf16>
    %c0_2 = arith.constant 0 : index
    %c0_3 = arith.constant 0 : index
    %c0_4 = arith.constant 0 : index
    %3 = vector.load %arg2[%c0_2, %c0_3, %c0_4] : memref<1x8x1xf32, #tpu.memory_space<vmem>>, vector<1x8x1xf32>
    %4 = vector.shape_cast %3 : vector<1x8x1xf32> to vector<8x1xf32>
    %c0_5 = arith.constant 0 : index
    %c0_6 = arith.constant 0 : index
    %5 = vector.load %arg3[%c0_5, %c0_6] : memref<976x128xbf16, #tpu.memory_space<vmem>>, vector<16x128xbf16>
    %cst = arith.constant dense<0.000000e+00> : vector<8x128xf32>
    %6 = tpu.matmul %2, %5, %cst {dimension_numbers = #tpu.dot_dimension_numbers<[1], [0], [0], [1], [0, 0, 1, 1], [], []>} : vector<8x16xbf16>, vector<16x128xbf16>, vector<8x128xf32> -> vector<8x128xf32>
    %c0_7 = arith.constant 0 : index
    %c0_8 = arith.constant 0 : index
    %7 = vector.load %arg4[%c0_7, %c0_8] : memref<184x128xf32, #tpu.memory_space<vmem>>, vector<1x128xf32>
    %8 = vector.broadcast %7 : vector<1x128xf32> to vector<8x128xf32>
    %9 = arith.addf %6, %8 : vector<8x128xf32>
    %cst_9 = arith.constant 0.000000e+00 : f32
    %10 = vector.broadcast %cst_9 : f32 to vector<8x128xf32>
    %11 = arith.maximumf %9, %10 : vector<8x128xf32>
    %12 = arith.truncf %11 : vector<8x128xf32> to vector<8x128xbf16>
    %c144 = arith.constant 144 : index
    %c0_10 = arith.constant 0 : index
    %13 = vector.load %arg3[%c144, %c0_10] : memref<976x128xbf16, #tpu.memory_space<vmem>>, vector<128x128xbf16>
    %cst_11 = arith.constant dense<0.000000e+00> : vector<8x128xf32>
    %14 = tpu.matmul %12, %13, %cst_11 {dimension_numbers = #tpu.dot_dimension_numbers<[1], [0], [0], [1], [0, 0, 1, 1], [], []>} : vector<8x128xbf16>, vector<128x128xbf16>, vector<8x128xf32> -> vector<8x128xf32>
    %c56 = arith.constant 56 : index
    %c0_12 = arith.constant 0 : index
    %15 = vector.load %arg4[%c56, %c0_12] : memref<184x128xf32, #tpu.memory_space<vmem>>, vector<1x128xf32>
    %16 = vector.broadcast %15 : vector<1x128xf32> to vector<8x128xf32>
    %17 = arith.addf %14, %16 : vector<8x128xf32>
    %18 = vector.extract_strided_slice %17 {offsets = [0, 32], sizes = [8, 32], strides = [1, 1]} : vector<8x128xf32> to vector<8x32xf32>
    %19 = tpu.transpose %18, [1, 0] : vector<8x32xf32> -> vector<32x8xf32>
    %c272 = arith.constant 272 : index
    %c0_13 = arith.constant 0 : index
    %20 = vector.load %arg3[%c272, %c0_13] : memref<976x128xbf16, #tpu.memory_space<vmem>>, vector<32x128xbf16>
    %21 = vector.extract_strided_slice %17 {offsets = [0, 0], sizes = [8, 8], strides = [1, 1]} : vector<8x128xf32> to vector<8x8xf32>
    %22 = vector.extract_strided_slice %17 {offsets = [0, 64], sizes = [8, 8], strides = [1, 1]} : vector<8x128xf32> to vector<8x8xf32>
    %23 = vector.extract_strided_slice %19 {offsets = [0, 0], sizes = [8, 8], strides = [1, 1]} : vector<32x8xf32> to vector<8x8xf32>
    %cst_14 = arith.constant dense<0.000000e+00> : vector<8x8xf32>
    %24 = tpu.matmul %21, %23, %cst_14 {dimension_numbers = #tpu.dot_dimension_numbers<[1], [0], [0], [1], [0, 0, 1, 1], [], []>} : vector<8x8xf32>, vector<8x8xf32>, vector<8x8xf32> -> vector<8x8xf32>
    %cst_15 = arith.constant 0.353553385 : f32
    %25 = vector.broadcast %cst_15 : f32 to vector<8x8xf32>
    %26 = arith.mulf %24, %25 : vector<8x8xf32>
    %cst_16 = arith.constant dense<0xFF800000> : vector<8xf32>
    %27 = vector.multi_reduction <maximumf>, %26, %cst_16 [1] : vector<8x8xf32> to vector<8xf32>
    %28 = vector.shape_cast %27 : vector<8xf32> to vector<8x1xf32>
    %29 = vector.broadcast %28 : vector<8x1xf32> to vector<8x8xf32>
    %30 = arith.subf %26, %29 : vector<8x8xf32>
    %31 = math.exp %30 : vector<8x8xf32>
    %cst_17 = arith.constant dense<0.000000e+00> : vector<8xf32>
    %32 = vector.multi_reduction <add>, %31, %cst_17 [1] : vector<8x8xf32> to vector<8xf32>
    %33 = vector.shape_cast %32 : vector<8xf32> to vector<8x1xf32>
    %34 = tpu.reciprocal %33 {approx = true} : vector<8x1xf32> -> vector<8x1xf32>
    %35 = vector.broadcast %34 : vector<8x1xf32> to vector<8x8xf32>
    %36 = arith.mulf %31, %35 : vector<8x8xf32>
    %cst_18 = arith.constant dense<0.000000e+00> : vector<8x8xf32>
    %37 = tpu.matmul %36, %22, %cst_18 {dimension_numbers = #tpu.dot_dimension_numbers<[1], [0], [0], [1], [0, 0, 1, 1], [], []>} : vector<8x8xf32>, vector<8x8xf32>, vector<8x8xf32> -> vector<8x8xf32>
    %38 = arith.truncf %37 : vector<8x8xf32> to vector<8x8xbf16>
    %39 = vector.extract_strided_slice %20 {offsets = [0, 0], sizes = [8, 128], strides = [1, 1]} : vector<32x128xbf16> to vector<8x128xbf16>
    %cst_19 = arith.constant dense<0.000000e+00> : vector<8x128xf32>
    %40 = tpu.matmul %38, %39, %cst_19 {dimension_numbers = #tpu.dot_dimension_numbers<[1], [0], [0], [1], [0, 0, 1, 1], [], []>} : vector<8x8xbf16>, vector<8x128xbf16>, vector<8x128xf32> -> vector<8x128xf32>
    %41 = vector.extract_strided_slice %17 {offsets = [0, 8], sizes = [8, 8], strides = [1, 1]} : vector<8x128xf32> to vector<8x8xf32>
    %42 = vector.extract_strided_slice %17 {offsets = [0, 72], sizes = [8, 8], strides = [1, 1]} : vector<8x128xf32> to vector<8x8xf32>
    %43 = vector.extract_strided_slice %19 {offsets = [8, 0], sizes = [8, 8], strides = [1, 1]} : vector<32x8xf32> to vector<8x8xf32>
    %cst_20 = arith.constant dense<0.000000e+00> : vector<8x8xf32>
    %44 = tpu.matmul %41, %43, %cst_20 {dimension_numbers = #tpu.dot_dimension_numbers<[1], [0], [0], [1], [0, 0, 1, 1], [], []>} : vector<8x8xf32>, vector<8x8xf32>, vector<8x8xf32> -> vector<8x8xf32>
    %cst_21 = arith.constant 0.353553385 : f32
    %45 = vector.broadcast %cst_21 : f32 to vector<8x8xf32>
    %46 = arith.mulf %44, %45 : vector<8x8xf32>
    %cst_22 = arith.constant dense<0xFF800000> : vector<8xf32>
    %47 = vector.multi_reduction <maximumf>, %46, %cst_22 [1] : vector<8x8xf32> to vector<8xf32>
    %48 = vector.shape_cast %47 : vector<8xf32> to vector<8x1xf32>
    %49 = vector.broadcast %48 : vector<8x1xf32> to vector<8x8xf32>
    %50 = arith.subf %46, %49 : vector<8x8xf32>
    %51 = math.exp %50 : vector<8x8xf32>
    %cst_23 = arith.constant dense<0.000000e+00> : vector<8xf32>
    %52 = vector.multi_reduction <add>, %51, %cst_23 [1] : vector<8x8xf32> to vector<8xf32>
    %53 = vector.shape_cast %52 : vector<8xf32> to vector<8x1xf32>
    %54 = tpu.reciprocal %53 {approx = true} : vector<8x1xf32> -> vector<8x1xf32>
    %55 = vector.broadcast %54 : vector<8x1xf32> to vector<8x8xf32>
    %56 = arith.mulf %51, %55 : vector<8x8xf32>
    %cst_24 = arith.constant dense<0.000000e+00> : vector<8x8xf32>
    %57 = tpu.matmul %56, %42, %cst_24 {dimension_numbers = #tpu.dot_dimension_numbers<[1], [0], [0], [1], [0, 0, 1, 1], [], []>} : vector<8x8xf32>, vector<8x8xf32>, vector<8x8xf32> -> vector<8x8xf32>
    %58 = arith.truncf %57 : vector<8x8xf32> to vector<8x8xbf16>
    %59 = vector.extract_strided_slice %20 {offsets = [8, 0], sizes = [8, 128], strides = [1, 1]} : vector<32x128xbf16> to vector<8x128xbf16>
    %cst_25 = arith.constant dense<0.000000e+00> : vector<8x128xf32>
    %60 = tpu.matmul %58, %59, %cst_25 {dimension_numbers = #tpu.dot_dimension_numbers<[1], [0], [0], [1], [0, 0, 1, 1], [], []>} : vector<8x8xbf16>, vector<8x128xbf16>, vector<8x128xf32> -> vector<8x128xf32>
    %61 = arith.addf %40, %60 : vector<8x128xf32>
    %62 = vector.extract_strided_slice %17 {offsets = [0, 16], sizes = [8, 8], strides = [1, 1]} : vector<8x128xf32> to vector<8x8xf32>
    %63 = vector.extract_strided_slice %17 {offsets = [0, 80], sizes = [8, 8], strides = [1, 1]} : vector<8x128xf32> to vector<8x8xf32>
    %64 = vector.extract_strided_slice %19 {offsets = [16, 0], sizes = [8, 8], strides = [1, 1]} : vector<32x8xf32> to vector<8x8xf32>
    %cst_26 = arith.constant dense<0.000000e+00> : vector<8x8xf32>
    %65 = tpu.matmul %62, %64, %cst_26 {dimension_numbers = #tpu.dot_dimension_numbers<[1], [0], [0], [1], [0, 0, 1, 1], [], []>} : vector<8x8xf32>, vector<8x8xf32>, vector<8x8xf32> -> vector<8x8xf32>
    %cst_27 = arith.constant 0.353553385 : f32
    %66 = vector.broadcast %cst_27 : f32 to vector<8x8xf32>
    %67 = arith.mulf %65, %66 : vector<8x8xf32>
    %cst_28 = arith.constant dense<0xFF800000> : vector<8xf32>
    %68 = vector.multi_reduction <maximumf>, %67, %cst_28 [1] : vector<8x8xf32> to vector<8xf32>
    %69 = vector.shape_cast %68 : vector<8xf32> to vector<8x1xf32>
    %70 = vector.broadcast %69 : vector<8x1xf32> to vector<8x8xf32>
    %71 = arith.subf %67, %70 : vector<8x8xf32>
    %72 = math.exp %71 : vector<8x8xf32>
    %cst_29 = arith.constant dense<0.000000e+00> : vector<8xf32>
    %73 = vector.multi_reduction <add>, %72, %cst_29 [1] : vector<8x8xf32> to vector<8xf32>
    %74 = vector.shape_cast %73 : vector<8xf32> to vector<8x1xf32>
    %75 = tpu.reciprocal %74 {approx = true} : vector<8x1xf32> -> vector<8x1xf32>
    %76 = vector.broadcast %75 : vector<8x1xf32> to vector<8x8xf32>
    %77 = arith.mulf %72, %76 : vector<8x8xf32>
    %cst_30 = arith.constant dense<0.000000e+00> : vector<8x8xf32>
    %78 = tpu.matmul %77, %63, %cst_30 {dimension_numbers = #tpu.dot_dimension_numbers<[1], [0], [0], [1], [0, 0, 1, 1], [], []>} : vector<8x8xf32>, vector<8x8xf32>, vector<8x8xf32> -> vector<8x8xf32>
    %79 = arith.truncf %78 : vector<8x8xf32> to vector<8x8xbf16>
    %80 = vector.extract_strided_slice %20 {offsets = [16, 0], sizes = [8, 128], strides = [1, 1]} : vector<32x128xbf16> to vector<8x128xbf16>
    %cst_31 = arith.constant dense<0.000000e+00> : vector<8x128xf32>
    %81 = tpu.matmul %79, %80, %cst_31 {dimension_numbers = #tpu.dot_dimension_numbers<[1], [0], [0], [1], [0, 0, 1, 1], [], []>} : vector<8x8xbf16>, vector<8x128xbf16>, vector<8x128xf32> -> vector<8x128xf32>
    %82 = arith.addf %61, %81 : vector<8x128xf32>
    %83 = vector.extract_strided_slice %17 {offsets = [0, 24], sizes = [8, 8], strides = [1, 1]} : vector<8x128xf32> to vector<8x8xf32>
    %84 = vector.extract_strided_slice %17 {offsets = [0, 88], sizes = [8, 8], strides = [1, 1]} : vector<8x128xf32> to vector<8x8xf32>
    %85 = vector.extract_strided_slice %19 {offsets = [24, 0], sizes = [8, 8], strides = [1, 1]} : vector<32x8xf32> to vector<8x8xf32>
    %cst_32 = arith.constant dense<0.000000e+00> : vector<8x8xf32>
    %86 = tpu.matmul %83, %85, %cst_32 {dimension_numbers = #tpu.dot_dimension_numbers<[1], [0], [0], [1], [0, 0, 1, 1], [], []>} : vector<8x8xf32>, vector<8x8xf32>, vector<8x8xf32> -> vector<8x8xf32>
    %cst_33 = arith.constant 0.353553385 : f32
    %87 = vector.broadcast %cst_33 : f32 to vector<8x8xf32>
    %88 = arith.mulf %86, %87 : vector<8x8xf32>
    %cst_34 = arith.constant dense<0xFF800000> : vector<8xf32>
    %89 = vector.multi_reduction <maximumf>, %88, %cst_34 [1] : vector<8x8xf32> to vector<8xf32>
    %90 = vector.shape_cast %89 : vector<8xf32> to vector<8x1xf32>
    %91 = vector.broadcast %90 : vector<8x1xf32> to vector<8x8xf32>
    %92 = arith.subf %88, %91 : vector<8x8xf32>
    %93 = math.exp %92 : vector<8x8xf32>
    %cst_35 = arith.constant dense<0.000000e+00> : vector<8xf32>
    %94 = vector.multi_reduction <add>, %93, %cst_35 [1] : vector<8x8xf32> to vector<8xf32>
    %95 = vector.shape_cast %94 : vector<8xf32> to vector<8x1xf32>
    %96 = tpu.reciprocal %95 {approx = true} : vector<8x1xf32> -> vector<8x1xf32>
    %97 = vector.broadcast %96 : vector<8x1xf32> to vector<8x8xf32>
    %98 = arith.mulf %93, %97 : vector<8x8xf32>
    %cst_36 = arith.constant dense<0.000000e+00> : vector<8x8xf32>
    %99 = tpu.matmul %98, %84, %cst_36 {dimension_numbers = #tpu.dot_dimension_numbers<[1], [0], [0], [1], [0, 0, 1, 1], [], []>} : vector<8x8xf32>, vector<8x8xf32>, vector<8x8xf32> -> vector<8x8xf32>
    %100 = arith.truncf %99 : vector<8x8xf32> to vector<8x8xbf16>
    %101 = vector.extract_strided_slice %20 {offsets = [24, 0], sizes = [8, 128], strides = [1, 1]} : vector<32x128xbf16> to vector<8x128xbf16>
    %cst_37 = arith.constant dense<0.000000e+00> : vector<8x128xf32>
    %102 = tpu.matmul %100, %101, %cst_37 {dimension_numbers = #tpu.dot_dimension_numbers<[1], [0], [0], [1], [0, 0, 1, 1], [], []>} : vector<8x8xbf16>, vector<8x128xbf16>, vector<8x128xf32> -> vector<8x128xf32>
    %103 = arith.addf %82, %102 : vector<8x128xf32>
    %c64 = arith.constant 64 : index
    %c0_38 = arith.constant 0 : index
    %104 = vector.load %arg4[%c64, %c0_38] : memref<184x128xf32, #tpu.memory_space<vmem>>, vector<1x128xf32>
    %105 = vector.broadcast %104 : vector<1x128xf32> to vector<8x128xf32>
    %106 = arith.addf %103, %105 : vector<8x128xf32>
    %107 = arith.addf %11, %106 : vector<8x128xf32>
    %c72 = arith.constant 72 : index
    %c0_39 = arith.constant 0 : index
    %108 = vector.load %arg4[%c72, %c0_39] : memref<184x128xf32, #tpu.memory_space<vmem>>, vector<1x128xf32>
    %c80 = arith.constant 80 : index
    %c0_40 = arith.constant 0 : index
    %109 = vector.load %arg4[%c80, %c0_40] : memref<184x128xf32, #tpu.memory_space<vmem>>, vector<1x128xf32>
    %cst_41 = arith.constant dense<0.000000e+00> : vector<8xf32>
    %110 = vector.multi_reduction <add>, %107, %cst_41 [1] : vector<8x128xf32> to vector<8xf32>
    %111 = vector.shape_cast %110 : vector<8xf32> to vector<8x1xf32>
    %cst_42 = arith.constant 3.125000e-02 : f32
    %112 = vector.broadcast %cst_42 : f32 to vector<8x1xf32>
    %113 = arith.mulf %111, %112 : vector<8x1xf32>
    %114 = arith.mulf %107, %107 : vector<8x128xf32>
    %cst_43 = arith.constant dense<0.000000e+00> : vector<8xf32>
    %115 = vector.multi_reduction <add>, %114, %cst_43 [1] : vector<8x128xf32> to vector<8xf32>
    %116 = vector.shape_cast %115 : vector<8xf32> to vector<8x1xf32>
    %cst_44 = arith.constant 3.125000e-02 : f32
    %117 = vector.broadcast %cst_44 : f32 to vector<8x1xf32>
    %118 = arith.mulf %116, %117 : vector<8x1xf32>
    %119 = arith.mulf %113, %113 : vector<8x1xf32>
    %120 = arith.subf %118, %119 : vector<8x1xf32>
    %121 = vector.broadcast %113 : vector<8x1xf32> to vector<8x128xf32>
    %122 = arith.subf %107, %121 : vector<8x128xf32>
    %cst_45 = arith.constant 9.99999974E-6 : f32
    %123 = vector.broadcast %cst_45 : f32 to vector<8x1xf32>
    %124 = arith.addf %120, %123 : vector<8x1xf32>
    %125 = math.rsqrt %124 : vector<8x1xf32>
    %126 = vector.broadcast %125 : vector<8x1xf32> to vector<8x128xf32>
    %127 = arith.mulf %122, %126 : vector<8x128xf32>
    %128 = vector.broadcast %108 : vector<1x128xf32> to vector<8x128xf32>
    %129 = arith.mulf %127, %128 : vector<8x128xf32>
    %130 = vector.broadcast %109 : vector<1x128xf32> to vector<8x128xf32>
    %131 = arith.addf %129, %130 : vector<8x128xf32>
    %132 = arith.truncf %131 : vector<8x128xf32> to vector<8x128xbf16>
    %c304 = arith.constant 304 : index
    %c0_46 = arith.constant 0 : index
    %133 = vector.load %arg3[%c304, %c0_46] : memref<976x128xbf16, #tpu.memory_space<vmem>>, vector<128x128xbf16>
    %cst_47 = arith.constant dense<0.000000e+00> : vector<8x128xf32>
    %134 = tpu.matmul %132, %133, %cst_47 {dimension_numbers = #tpu.dot_dimension_numbers<[1], [0], [0], [1], [0, 0, 1, 1], [], []>} : vector<8x128xbf16>, vector<128x128xbf16>, vector<8x128xf32> -> vector<8x128xf32>
    %c88 = arith.constant 88 : index
    %c0_48 = arith.constant 0 : index
    %135 = vector.load %arg4[%c88, %c0_48] : memref<184x128xf32, #tpu.memory_space<vmem>>, vector<1x128xf32>
    %136 = vector.broadcast %135 : vector<1x128xf32> to vector<8x128xf32>
    %137 = arith.addf %134, %136 : vector<8x128xf32>
    %cst_49 = arith.constant 0.000000e+00 : f32
    %138 = vector.broadcast %cst_49 : f32 to vector<8x128xf32>
    %139 = arith.maximumf %137, %138 : vector<8x128xf32>
    %140 = arith.truncf %139 : vector<8x128xf32> to vector<8x128xbf16>
    %c432 = arith.constant 432 : index
    %c0_50 = arith.constant 0 : index
    %141 = vector.load %arg3[%c432, %c0_50] : memref<976x128xbf16, #tpu.memory_space<vmem>>, vector<128x128xbf16>
    %cst_51 = arith.constant dense<0.000000e+00> : vector<8x128xf32>
    %142 = tpu.matmul %140, %141, %cst_51 {dimension_numbers = #tpu.dot_dimension_numbers<[1], [0], [0], [1], [0, 0, 1, 1], [], []>} : vector<8x128xbf16>, vector<128x128xbf16>, vector<8x128xf32> -> vector<8x128xf32>
    %c96 = arith.constant 96 : index
    %c0_52 = arith.constant 0 : index
    %143 = vector.load %arg4[%c96, %c0_52] : memref<184x128xf32, #tpu.memory_space<vmem>>, vector<1x128xf32>
    %144 = vector.broadcast %143 : vector<1x128xf32> to vector<8x128xf32>
    %145 = arith.addf %142, %144 : vector<8x128xf32>
    %146 = arith.addf %131, %145 : vector<8x128xf32>
    %c104 = arith.constant 104 : index
    %c0_53 = arith.constant 0 : index
    %147 = vector.load %arg4[%c104, %c0_53] : memref<184x128xf32, #tpu.memory_space<vmem>>, vector<1x128xf32>
    %c112 = arith.constant 112 : index
    %c0_54 = arith.constant 0 : index
    %148 = vector.load %arg4[%c112, %c0_54] : memref<184x128xf32, #tpu.memory_space<vmem>>, vector<1x128xf32>
    %cst_55 = arith.constant dense<0.000000e+00> : vector<8xf32>
    %149 = vector.multi_reduction <add>, %146, %cst_55 [1] : vector<8x128xf32> to vector<8xf32>
    %150 = vector.shape_cast %149 : vector<8xf32> to vector<8x1xf32>
    %cst_56 = arith.constant 3.125000e-02 : f32
    %151 = vector.broadcast %cst_56 : f32 to vector<8x1xf32>
    %152 = arith.mulf %150, %151 : vector<8x1xf32>
    %153 = arith.mulf %146, %146 : vector<8x128xf32>
    %cst_57 = arith.constant dense<0.000000e+00> : vector<8xf32>
    %154 = vector.multi_reduction <add>, %153, %cst_57 [1] : vector<8x128xf32> to vector<8xf32>
    %155 = vector.shape_cast %154 : vector<8xf32> to vector<8x1xf32>
    %cst_58 = arith.constant 3.125000e-02 : f32
    %156 = vector.broadcast %cst_58 : f32 to vector<8x1xf32>
    %157 = arith.mulf %155, %156 : vector<8x1xf32>
    %158 = arith.mulf %152, %152 : vector<8x1xf32>
    %159 = arith.subf %157, %158 : vector<8x1xf32>
    %160 = vector.broadcast %152 : vector<8x1xf32> to vector<8x128xf32>
    %161 = arith.subf %146, %160 : vector<8x128xf32>
    %cst_59 = arith.constant 9.99999974E-6 : f32
    %162 = vector.broadcast %cst_59 : f32 to vector<8x1xf32>
    %163 = arith.addf %159, %162 : vector<8x1xf32>
    %164 = math.rsqrt %163 : vector<8x1xf32>
    %165 = vector.broadcast %164 : vector<8x1xf32> to vector<8x128xf32>
    %166 = arith.mulf %161, %165 : vector<8x128xf32>
    %167 = vector.broadcast %147 : vector<1x128xf32> to vector<8x128xf32>
    %168 = arith.mulf %166, %167 : vector<8x128xf32>
    %169 = vector.broadcast %148 : vector<1x128xf32> to vector<8x128xf32>
    %170 = arith.addf %168, %169 : vector<8x128xf32>
    %171 = arith.truncf %170 : vector<8x128xf32> to vector<8x128xbf16>
    %c560 = arith.constant 560 : index
    %c0_60 = arith.constant 0 : index
    %172 = vector.load %arg3[%c560, %c0_60] : memref<976x128xbf16, #tpu.memory_space<vmem>>, vector<128x128xbf16>
    %cst_61 = arith.constant dense<0.000000e+00> : vector<8x128xf32>
    %173 = tpu.matmul %171, %172, %cst_61 {dimension_numbers = #tpu.dot_dimension_numbers<[1], [0], [0], [1], [0, 0, 1, 1], [], []>} : vector<8x128xbf16>, vector<128x128xbf16>, vector<8x128xf32> -> vector<8x128xf32>
    %c120 = arith.constant 120 : index
    %c0_62 = arith.constant 0 : index
    %174 = vector.load %arg4[%c120, %c0_62] : memref<184x128xf32, #tpu.memory_space<vmem>>, vector<1x128xf32>
    %175 = vector.broadcast %174 : vector<1x128xf32> to vector<8x128xf32>
    %176 = arith.addf %173, %175 : vector<8x128xf32>
    %177 = vector.extract_strided_slice %176 {offsets = [0, 32], sizes = [8, 32], strides = [1, 1]} : vector<8x128xf32> to vector<8x32xf32>
    %178 = tpu.transpose %177, [1, 0] : vector<8x32xf32> -> vector<32x8xf32>
    %c688 = arith.constant 688 : index
    %c0_63 = arith.constant 0 : index
    %179 = vector.load %arg3[%c688, %c0_63] : memref<976x128xbf16, #tpu.memory_space<vmem>>, vector<32x128xbf16>
    %180 = vector.extract_strided_slice %176 {offsets = [0, 0], sizes = [8, 8], strides = [1, 1]} : vector<8x128xf32> to vector<8x8xf32>
    %181 = vector.extract_strided_slice %176 {offsets = [0, 64], sizes = [8, 8], strides = [1, 1]} : vector<8x128xf32> to vector<8x8xf32>
    %182 = vector.extract_strided_slice %178 {offsets = [0, 0], sizes = [8, 8], strides = [1, 1]} : vector<32x8xf32> to vector<8x8xf32>
    %cst_64 = arith.constant dense<0.000000e+00> : vector<8x8xf32>
    %183 = tpu.matmul %180, %182, %cst_64 {dimension_numbers = #tpu.dot_dimension_numbers<[1], [0], [0], [1], [0, 0, 1, 1], [], []>} : vector<8x8xf32>, vector<8x8xf32>, vector<8x8xf32> -> vector<8x8xf32>
    %cst_65 = arith.constant 0.353553385 : f32
    %184 = vector.broadcast %cst_65 : f32 to vector<8x8xf32>
    %185 = arith.mulf %183, %184 : vector<8x8xf32>
    %cst_66 = arith.constant dense<0xFF800000> : vector<8xf32>
    %186 = vector.multi_reduction <maximumf>, %185, %cst_66 [1] : vector<8x8xf32> to vector<8xf32>
    %187 = vector.shape_cast %186 : vector<8xf32> to vector<8x1xf32>
    %188 = vector.broadcast %187 : vector<8x1xf32> to vector<8x8xf32>
    %189 = arith.subf %185, %188 : vector<8x8xf32>
    %190 = math.exp %189 : vector<8x8xf32>
    %cst_67 = arith.constant dense<0.000000e+00> : vector<8xf32>
    %191 = vector.multi_reduction <add>, %190, %cst_67 [1] : vector<8x8xf32> to vector<8xf32>
    %192 = vector.shape_cast %191 : vector<8xf32> to vector<8x1xf32>
    %193 = tpu.reciprocal %192 {approx = true} : vector<8x1xf32> -> vector<8x1xf32>
    %194 = vector.broadcast %193 : vector<8x1xf32> to vector<8x8xf32>
    %195 = arith.mulf %190, %194 : vector<8x8xf32>
    %cst_68 = arith.constant dense<0.000000e+00> : vector<8x8xf32>
    %196 = tpu.matmul %195, %181, %cst_68 {dimension_numbers = #tpu.dot_dimension_numbers<[1], [0], [0], [1], [0, 0, 1, 1], [], []>} : vector<8x8xf32>, vector<8x8xf32>, vector<8x8xf32> -> vector<8x8xf32>
    %197 = arith.truncf %196 : vector<8x8xf32> to vector<8x8xbf16>
    %198 = vector.extract_strided_slice %179 {offsets = [0, 0], sizes = [8, 128], strides = [1, 1]} : vector<32x128xbf16> to vector<8x128xbf16>
    %cst_69 = arith.constant dense<0.000000e+00> : vector<8x128xf32>
    %199 = tpu.matmul %197, %198, %cst_69 {dimension_numbers = #tpu.dot_dimension_numbers<[1], [0], [0], [1], [0, 0, 1, 1], [], []>} : vector<8x8xbf16>, vector<8x128xbf16>, vector<8x128xf32> -> vector<8x128xf32>
    %200 = vector.extract_strided_slice %176 {offsets = [0, 8], sizes = [8, 8], strides = [1, 1]} : vector<8x128xf32> to vector<8x8xf32>
    %201 = vector.extract_strided_slice %176 {offsets = [0, 72], sizes = [8, 8], strides = [1, 1]} : vector<8x128xf32> to vector<8x8xf32>
    %202 = vector.extract_strided_slice %178 {offsets = [8, 0], sizes = [8, 8], strides = [1, 1]} : vector<32x8xf32> to vector<8x8xf32>
    %cst_70 = arith.constant dense<0.000000e+00> : vector<8x8xf32>
    %203 = tpu.matmul %200, %202, %cst_70 {dimension_numbers = #tpu.dot_dimension_numbers<[1], [0], [0], [1], [0, 0, 1, 1], [], []>} : vector<8x8xf32>, vector<8x8xf32>, vector<8x8xf32> -> vector<8x8xf32>
    %cst_71 = arith.constant 0.353553385 : f32
    %204 = vector.broadcast %cst_71 : f32 to vector<8x8xf32>
    %205 = arith.mulf %203, %204 : vector<8x8xf32>
    %cst_72 = arith.constant dense<0xFF800000> : vector<8xf32>
    %206 = vector.multi_reduction <maximumf>, %205, %cst_72 [1] : vector<8x8xf32> to vector<8xf32>
    %207 = vector.shape_cast %206 : vector<8xf32> to vector<8x1xf32>
    %208 = vector.broadcast %207 : vector<8x1xf32> to vector<8x8xf32>
    %209 = arith.subf %205, %208 : vector<8x8xf32>
    %210 = math.exp %209 : vector<8x8xf32>
    %cst_73 = arith.constant dense<0.000000e+00> : vector<8xf32>
    %211 = vector.multi_reduction <add>, %210, %cst_73 [1] : vector<8x8xf32> to vector<8xf32>
    %212 = vector.shape_cast %211 : vector<8xf32> to vector<8x1xf32>
    %213 = tpu.reciprocal %212 {approx = true} : vector<8x1xf32> -> vector<8x1xf32>
    %214 = vector.broadcast %213 : vector<8x1xf32> to vector<8x8xf32>
    %215 = arith.mulf %210, %214 : vector<8x8xf32>
    %cst_74 = arith.constant dense<0.000000e+00> : vector<8x8xf32>
    %216 = tpu.matmul %215, %201, %cst_74 {dimension_numbers = #tpu.dot_dimension_numbers<[1], [0], [0], [1], [0, 0, 1, 1], [], []>} : vector<8x8xf32>, vector<8x8xf32>, vector<8x8xf32> -> vector<8x8xf32>
    %217 = arith.truncf %216 : vector<8x8xf32> to vector<8x8xbf16>
    %218 = vector.extract_strided_slice %179 {offsets = [8, 0], sizes = [8, 128], strides = [1, 1]} : vector<32x128xbf16> to vector<8x128xbf16>
    %cst_75 = arith.constant dense<0.000000e+00> : vector<8x128xf32>
    %219 = tpu.matmul %217, %218, %cst_75 {dimension_numbers = #tpu.dot_dimension_numbers<[1], [0], [0], [1], [0, 0, 1, 1], [], []>} : vector<8x8xbf16>, vector<8x128xbf16>, vector<8x128xf32> -> vector<8x128xf32>
    %220 = arith.addf %199, %219 : vector<8x128xf32>
    %221 = vector.extract_strided_slice %176 {offsets = [0, 16], sizes = [8, 8], strides = [1, 1]} : vector<8x128xf32> to vector<8x8xf32>
    %222 = vector.extract_strided_slice %176 {offsets = [0, 80], sizes = [8, 8], strides = [1, 1]} : vector<8x128xf32> to vector<8x8xf32>
    %223 = vector.extract_strided_slice %178 {offsets = [16, 0], sizes = [8, 8], strides = [1, 1]} : vector<32x8xf32> to vector<8x8xf32>
    %cst_76 = arith.constant dense<0.000000e+00> : vector<8x8xf32>
    %224 = tpu.matmul %221, %223, %cst_76 {dimension_numbers = #tpu.dot_dimension_numbers<[1], [0], [0], [1], [0, 0, 1, 1], [], []>} : vector<8x8xf32>, vector<8x8xf32>, vector<8x8xf32> -> vector<8x8xf32>
    %cst_77 = arith.constant 0.353553385 : f32
    %225 = vector.broadcast %cst_77 : f32 to vector<8x8xf32>
    %226 = arith.mulf %224, %225 : vector<8x8xf32>
    %cst_78 = arith.constant dense<0xFF800000> : vector<8xf32>
    %227 = vector.multi_reduction <maximumf>, %226, %cst_78 [1] : vector<8x8xf32> to vector<8xf32>
    %228 = vector.shape_cast %227 : vector<8xf32> to vector<8x1xf32>
    %229 = vector.broadcast %228 : vector<8x1xf32> to vector<8x8xf32>
    %230 = arith.subf %226, %229 : vector<8x8xf32>
    %231 = math.exp %230 : vector<8x8xf32>
    %cst_79 = arith.constant dense<0.000000e+00> : vector<8xf32>
    %232 = vector.multi_reduction <add>, %231, %cst_79 [1] : vector<8x8xf32> to vector<8xf32>
    %233 = vector.shape_cast %232 : vector<8xf32> to vector<8x1xf32>
    %234 = tpu.reciprocal %233 {approx = true} : vector<8x1xf32> -> vector<8x1xf32>
    %235 = vector.broadcast %234 : vector<8x1xf32> to vector<8x8xf32>
    %236 = arith.mulf %231, %235 : vector<8x8xf32>
    %cst_80 = arith.constant dense<0.000000e+00> : vector<8x8xf32>
    %237 = tpu.matmul %236, %222, %cst_80 {dimension_numbers = #tpu.dot_dimension_numbers<[1], [0], [0], [1], [0, 0, 1, 1], [], []>} : vector<8x8xf32>, vector<8x8xf32>, vector<8x8xf32> -> vector<8x8xf32>
    %238 = arith.truncf %237 : vector<8x8xf32> to vector<8x8xbf16>
    %239 = vector.extract_strided_slice %179 {offsets = [16, 0], sizes = [8, 128], strides = [1, 1]} : vector<32x128xbf16> to vector<8x128xbf16>
    %cst_81 = arith.constant dense<0.000000e+00> : vector<8x128xf32>
    %240 = tpu.matmul %238, %239, %cst_81 {dimension_numbers = #tpu.dot_dimension_numbers<[1], [0], [0], [1], [0, 0, 1, 1], [], []>} : vector<8x8xbf16>, vector<8x128xbf16>, vector<8x128xf32> -> vector<8x128xf32>
    %241 = arith.addf %220, %240 : vector<8x128xf32>
    %242 = vector.extract_strided_slice %176 {offsets = [0, 24], sizes = [8, 8], strides = [1, 1]} : vector<8x128xf32> to vector<8x8xf32>
    %243 = vector.extract_strided_slice %176 {offsets = [0, 88], sizes = [8, 8], strides = [1, 1]} : vector<8x128xf32> to vector<8x8xf32>
    %244 = vector.extract_strided_slice %178 {offsets = [24, 0], sizes = [8, 8], strides = [1, 1]} : vector<32x8xf32> to vector<8x8xf32>
    %cst_82 = arith.constant dense<0.000000e+00> : vector<8x8xf32>
    %245 = tpu.matmul %242, %244, %cst_82 {dimension_numbers = #tpu.dot_dimension_numbers<[1], [0], [0], [1], [0, 0, 1, 1], [], []>} : vector<8x8xf32>, vector<8x8xf32>, vector<8x8xf32> -> vector<8x8xf32>
    %cst_83 = arith.constant 0.353553385 : f32
    %246 = vector.broadcast %cst_83 : f32 to vector<8x8xf32>
    %247 = arith.mulf %245, %246 : vector<8x8xf32>
    %cst_84 = arith.constant dense<0xFF800000> : vector<8xf32>
    %248 = vector.multi_reduction <maximumf>, %247, %cst_84 [1] : vector<8x8xf32> to vector<8xf32>
    %249 = vector.shape_cast %248 : vector<8xf32> to vector<8x1xf32>
    %250 = vector.broadcast %249 : vector<8x1xf32> to vector<8x8xf32>
    %251 = arith.subf %247, %250 : vector<8x8xf32>
    %252 = math.exp %251 : vector<8x8xf32>
    %cst_85 = arith.constant dense<0.000000e+00> : vector<8xf32>
    %253 = vector.multi_reduction <add>, %252, %cst_85 [1] : vector<8x8xf32> to vector<8xf32>
    %254 = vector.shape_cast %253 : vector<8xf32> to vector<8x1xf32>
    %255 = tpu.reciprocal %254 {approx = true} : vector<8x1xf32> -> vector<8x1xf32>
    %256 = vector.broadcast %255 : vector<8x1xf32> to vector<8x8xf32>
    %257 = arith.mulf %252, %256 : vector<8x8xf32>
    %cst_86 = arith.constant dense<0.000000e+00> : vector<8x8xf32>
    %258 = tpu.matmul %257, %243, %cst_86 {dimension_numbers = #tpu.dot_dimension_numbers<[1], [0], [0], [1], [0, 0, 1, 1], [], []>} : vector<8x8xf32>, vector<8x8xf32>, vector<8x8xf32> -> vector<8x8xf32>
    %259 = arith.truncf %258 : vector<8x8xf32> to vector<8x8xbf16>
    %260 = vector.extract_strided_slice %179 {offsets = [24, 0], sizes = [8, 128], strides = [1, 1]} : vector<32x128xbf16> to vector<8x128xbf16>
    %cst_87 = arith.constant dense<0.000000e+00> : vector<8x128xf32>
    %261 = tpu.matmul %259, %260, %cst_87 {dimension_numbers = #tpu.dot_dimension_numbers<[1], [0], [0], [1], [0, 0, 1, 1], [], []>} : vector<8x8xbf16>, vector<8x128xbf16>, vector<8x128xf32> -> vector<8x128xf32>
    %262 = arith.addf %241, %261 : vector<8x128xf32>
    %c128 = arith.constant 128 : index
    %c0_88 = arith.constant 0 : index
    %263 = vector.load %arg4[%c128, %c0_88] : memref<184x128xf32, #tpu.memory_space<vmem>>, vector<1x128xf32>
    %264 = vector.broadcast %263 : vector<1x128xf32> to vector<8x128xf32>
    %265 = arith.addf %262, %264 : vector<8x128xf32>
    %266 = arith.addf %170, %265 : vector<8x128xf32>
    %c136 = arith.constant 136 : index
    %c0_89 = arith.constant 0 : index
    %267 = vector.load %arg4[%c136, %c0_89] : memref<184x128xf32, #tpu.memory_space<vmem>>, vector<1x128xf32>
    %c144_90 = arith.constant 144 : index
    %c0_91 = arith.constant 0 : index
    %268 = vector.load %arg4[%c144_90, %c0_91] : memref<184x128xf32, #tpu.memory_space<vmem>>, vector<1x128xf32>
    %cst_92 = arith.constant dense<0.000000e+00> : vector<8xf32>
    %269 = vector.multi_reduction <add>, %266, %cst_92 [1] : vector<8x128xf32> to vector<8xf32>
    %270 = vector.shape_cast %269 : vector<8xf32> to vector<8x1xf32>
    %cst_93 = arith.constant 3.125000e-02 : f32
    %271 = vector.broadcast %cst_93 : f32 to vector<8x1xf32>
    %272 = arith.mulf %270, %271 : vector<8x1xf32>
    %273 = arith.mulf %266, %266 : vector<8x128xf32>
    %cst_94 = arith.constant dense<0.000000e+00> : vector<8xf32>
    %274 = vector.multi_reduction <add>, %273, %cst_94 [1] : vector<8x128xf32> to vector<8xf32>
    %275 = vector.shape_cast %274 : vector<8xf32> to vector<8x1xf32>
    %cst_95 = arith.constant 3.125000e-02 : f32
    %276 = vector.broadcast %cst_95 : f32 to vector<8x1xf32>
    %277 = arith.mulf %275, %276 : vector<8x1xf32>
    %278 = arith.mulf %272, %272 : vector<8x1xf32>
    %279 = arith.subf %277, %278 : vector<8x1xf32>
    %280 = vector.broadcast %272 : vector<8x1xf32> to vector<8x128xf32>
    %281 = arith.subf %266, %280 : vector<8x128xf32>
    %cst_96 = arith.constant 9.99999974E-6 : f32
    %282 = vector.broadcast %cst_96 : f32 to vector<8x1xf32>
    %283 = arith.addf %279, %282 : vector<8x1xf32>
    %284 = math.rsqrt %283 : vector<8x1xf32>
    %285 = vector.broadcast %284 : vector<8x1xf32> to vector<8x128xf32>
    %286 = arith.mulf %281, %285 : vector<8x128xf32>
    %287 = vector.broadcast %267 : vector<1x128xf32> to vector<8x128xf32>
    %288 = arith.mulf %286, %287 : vector<8x128xf32>
    %289 = vector.broadcast %268 : vector<1x128xf32> to vector<8x128xf32>
    %290 = arith.addf %288, %289 : vector<8x128xf32>
    %291 = arith.truncf %290 : vector<8x128xf32> to vector<8x128xbf16>
    %c720 = arith.constant 720 : index
    %c0_97 = arith.constant 0 : index
    %292 = vector.load %arg3[%c720, %c0_97] : memref<976x128xbf16, #tpu.memory_space<vmem>>, vector<128x128xbf16>
    %cst_98 = arith.constant dense<0.000000e+00> : vector<8x128xf32>
    %293 = tpu.matmul %291, %292, %cst_98 {dimension_numbers = #tpu.dot_dimension_numbers<[1], [0], [0], [1], [0, 0, 1, 1], [], []>} : vector<8x128xbf16>, vector<128x128xbf16>, vector<8x128xf32> -> vector<8x128xf32>
    %c152 = arith.constant 152 : index
    %c0_99 = arith.constant 0 : index
    %294 = vector.load %arg4[%c152, %c0_99] : memref<184x128xf32, #tpu.memory_space<vmem>>, vector<1x128xf32>
    %295 = vector.broadcast %294 : vector<1x128xf32> to vector<8x128xf32>
    %296 = arith.addf %293, %295 : vector<8x128xf32>
    %cst_100 = arith.constant 0.000000e+00 : f32
    %297 = vector.broadcast %cst_100 : f32 to vector<8x128xf32>
    %298 = arith.maximumf %296, %297 : vector<8x128xf32>
    %299 = arith.truncf %298 : vector<8x128xf32> to vector<8x128xbf16>
    %c848 = arith.constant 848 : index
    %c0_101 = arith.constant 0 : index
    %300 = vector.load %arg3[%c848, %c0_101] : memref<976x128xbf16, #tpu.memory_space<vmem>>, vector<128x128xbf16>
    %cst_102 = arith.constant dense<0.000000e+00> : vector<8x128xf32>
    %301 = tpu.matmul %299, %300, %cst_102 {dimension_numbers = #tpu.dot_dimension_numbers<[1], [0], [0], [1], [0, 0, 1, 1], [], []>} : vector<8x128xbf16>, vector<128x128xbf16>, vector<8x128xf32> -> vector<8x128xf32>
    %c160 = arith.constant 160 : index
    %c0_103 = arith.constant 0 : index
    %302 = vector.load %arg4[%c160, %c0_103] : memref<184x128xf32, #tpu.memory_space<vmem>>, vector<1x128xf32>
    %303 = vector.broadcast %302 : vector<1x128xf32> to vector<8x128xf32>
    %304 = arith.addf %301, %303 : vector<8x128xf32>
    %305 = arith.addf %290, %304 : vector<8x128xf32>
    %c168 = arith.constant 168 : index
    %c0_104 = arith.constant 0 : index
    %306 = vector.load %arg4[%c168, %c0_104] : memref<184x128xf32, #tpu.memory_space<vmem>>, vector<1x128xf32>
    %c176 = arith.constant 176 : index
    %c0_105 = arith.constant 0 : index
    %307 = vector.load %arg4[%c176, %c0_105] : memref<184x128xf32, #tpu.memory_space<vmem>>, vector<1x128xf32>
    %cst_106 = arith.constant dense<0.000000e+00> : vector<8xf32>
    %308 = vector.multi_reduction <add>, %305, %cst_106 [1] : vector<8x128xf32> to vector<8xf32>
    %309 = vector.shape_cast %308 : vector<8xf32> to vector<8x1xf32>
    %cst_107 = arith.constant 3.125000e-02 : f32
    %310 = vector.broadcast %cst_107 : f32 to vector<8x1xf32>
    %311 = arith.mulf %309, %310 : vector<8x1xf32>
    %312 = arith.mulf %305, %305 : vector<8x128xf32>
    %cst_108 = arith.constant dense<0.000000e+00> : vector<8xf32>
    %313 = vector.multi_reduction <add>, %312, %cst_108 [1] : vector<8x128xf32> to vector<8xf32>
    %314 = vector.shape_cast %313 : vector<8xf32> to vector<8x1xf32>
    %cst_109 = arith.constant 3.125000e-02 : f32
    %315 = vector.broadcast %cst_109 : f32 to vector<8x1xf32>
    %316 = arith.mulf %314, %315 : vector<8x1xf32>
    %317 = arith.mulf %311, %311 : vector<8x1xf32>
    %318 = arith.subf %316, %317 : vector<8x1xf32>
    %319 = vector.broadcast %311 : vector<8x1xf32> to vector<8x128xf32>
    %320 = arith.subf %305, %319 : vector<8x128xf32>
    %cst_110 = arith.constant 9.99999974E-6 : f32
    %321 = vector.broadcast %cst_110 : f32 to vector<8x1xf32>
    %322 = arith.addf %318, %321 : vector<8x1xf32>
    %323 = math.rsqrt %322 : vector<8x1xf32>
    %324 = vector.broadcast %323 : vector<8x1xf32> to vector<8x128xf32>
    %325 = arith.mulf %320, %324 : vector<8x128xf32>
    %326 = vector.broadcast %306 : vector<1x128xf32> to vector<8x128xf32>
    %327 = arith.mulf %325, %326 : vector<8x128xf32>
    %328 = vector.broadcast %307 : vector<1x128xf32> to vector<8x128xf32>
    %329 = arith.addf %327, %328 : vector<8x128xf32>
    %c8 = arith.constant 8 : index
    %c0_111 = arith.constant 0 : index
    %330 = vector.load %arg4[%c8, %c0_111] : memref<184x128xf32, #tpu.memory_space<vmem>>, vector<1x128xf32>
    %c16 = arith.constant 16 : index
    %c0_112 = arith.constant 0 : index
    %331 = vector.load %arg4[%c16, %c0_112] : memref<184x128xf32, #tpu.memory_space<vmem>>, vector<1x128xf32>
    %cst_113 = arith.constant dense<0.000000e+00> : vector<8xf32>
    %332 = vector.multi_reduction <add>, %329, %cst_113 [1] : vector<8x128xf32> to vector<8xf32>
    %333 = vector.shape_cast %332 : vector<8xf32> to vector<8x1xf32>
    %cst_114 = arith.constant 3.125000e-02 : f32
    %334 = vector.broadcast %cst_114 : f32 to vector<8x1xf32>
    %335 = arith.mulf %333, %334 : vector<8x1xf32>
    %336 = arith.mulf %329, %329 : vector<8x128xf32>
    %cst_115 = arith.constant dense<0.000000e+00> : vector<8xf32>
    %337 = vector.multi_reduction <add>, %336, %cst_115 [1] : vector<8x128xf32> to vector<8xf32>
    %338 = vector.shape_cast %337 : vector<8xf32> to vector<8x1xf32>
    %cst_116 = arith.constant 3.125000e-02 : f32
    %339 = vector.broadcast %cst_116 : f32 to vector<8x1xf32>
    %340 = arith.mulf %338, %339 : vector<8x1xf32>
    %341 = arith.mulf %335, %335 : vector<8x1xf32>
    %342 = arith.subf %340, %341 : vector<8x1xf32>
    %343 = vector.broadcast %335 : vector<8x1xf32> to vector<8x128xf32>
    %344 = arith.subf %329, %343 : vector<8x128xf32>
    %cst_117 = arith.constant 9.99999974E-6 : f32
    %345 = vector.broadcast %cst_117 : f32 to vector<8x1xf32>
    %346 = arith.addf %342, %345 : vector<8x1xf32>
    %347 = math.rsqrt %346 : vector<8x1xf32>
    %348 = vector.broadcast %347 : vector<8x1xf32> to vector<8x128xf32>
    %349 = arith.mulf %344, %348 : vector<8x128xf32>
    %350 = vector.broadcast %330 : vector<1x128xf32> to vector<8x128xf32>
    %351 = arith.mulf %349, %350 : vector<8x128xf32>
    %352 = vector.broadcast %331 : vector<1x128xf32> to vector<8x128xf32>
    %353 = arith.addf %351, %352 : vector<8x128xf32>
    %354 = arith.truncf %353 : vector<8x128xf32> to vector<8x128xbf16>
    %c16_118 = arith.constant 16 : index
    %c0_119 = arith.constant 0 : index
    %355 = vector.load %arg3[%c16_118, %c0_119] : memref<976x128xbf16, #tpu.memory_space<vmem>>, vector<128x128xbf16>
    %cst_120 = arith.constant dense<0.000000e+00> : vector<8x128xf32>
    %356 = tpu.matmul %354, %355, %cst_120 {dimension_numbers = #tpu.dot_dimension_numbers<[1], [0], [0], [1], [0, 0, 1, 1], [], []>} : vector<8x128xbf16>, vector<128x128xbf16>, vector<8x128xf32> -> vector<8x128xf32>
    %c24 = arith.constant 24 : index
    %c0_121 = arith.constant 0 : index
    %357 = vector.load %arg4[%c24, %c0_121] : memref<184x128xf32, #tpu.memory_space<vmem>>, vector<1x128xf32>
    %358 = vector.broadcast %4 : vector<8x1xf32> to vector<8x128xf32>
    %359 = vector.broadcast %357 : vector<1x128xf32> to vector<8x128xf32>
    %360 = arith.mulf %358, %359 : vector<8x128xf32>
    %361 = arith.addf %356, %360 : vector<8x128xf32>
    %c32 = arith.constant 32 : index
    %c0_122 = arith.constant 0 : index
    %362 = vector.load %arg4[%c32, %c0_122] : memref<184x128xf32, #tpu.memory_space<vmem>>, vector<1x128xf32>
    %363 = vector.broadcast %362 : vector<1x128xf32> to vector<8x128xf32>
    %364 = arith.addf %361, %363 : vector<8x128xf32>
    %cst_123 = arith.constant 0.000000e+00 : f32
    %365 = vector.broadcast %cst_123 : f32 to vector<8x128xf32>
    %366 = arith.maximumf %364, %365 : vector<8x128xf32>
    %c40 = arith.constant 40 : index
    %c0_124 = arith.constant 0 : index
    %367 = vector.load %arg4[%c40, %c0_124] : memref<184x128xf32, #tpu.memory_space<vmem>>, vector<1x128xf32>
    %368 = vector.broadcast %367 : vector<1x128xf32> to vector<8x128xf32>
    %369 = arith.mulf %366, %368 : vector<8x128xf32>
    %cst_125 = arith.constant dense<0.000000e+00> : vector<8xf32>
    %370 = vector.multi_reduction <add>, %369, %cst_125 [1] : vector<8x128xf32> to vector<8xf32>
    %371 = vector.shape_cast %370 : vector<8xf32> to vector<8x1xf32>
    %c48 = arith.constant 48 : index
    %c0_126 = arith.constant 0 : index
    %372 = vector.load %arg4[%c48, %c0_126] : memref<184x128xf32, #tpu.memory_space<vmem>>, vector<1x128xf32>
    %373 = vector.extract_strided_slice %372 {offsets = [0, 0], sizes = [1, 1], strides = [1, 1]} : vector<1x128xf32> to vector<1x1xf32>
    %374 = vector.broadcast %373 : vector<1x1xf32> to vector<8x1xf32>
    %375 = arith.addf %371, %374 : vector<8x1xf32>
    %c0_127 = arith.constant 0 : index
    %c0_128 = arith.constant 0 : index
    %c0_129 = arith.constant 0 : index
    %376 = vector.load %arg5[%c0_127, %c0_128, %c0_129] : memref<1x8x1xf32, #tpu.memory_space<vmem>>, vector<1x8x1xf32>
    %377 = vector.shape_cast %376 : vector<1x8x1xf32> to vector<8x1xf32>
    %378 = vector.shape_cast %375 : vector<8x1xf32> to vector<1x8x1xf32>
    tpu.vector_store %arg5[%c0_127, %c0_128, %c0_129], %378 {strides = array<i32>} : memref<1x8x1xf32, #tpu.memory_space<vmem>>, vector<1x8x1xf32>,
    return
  }
  func.func @transform_0(%arg0: i32) -> (i32, i32, i32) {
    %c0_i32 = arith.constant 0 : i32
    %c0_i32_0 = arith.constant 0 : i32
    %c0_i32_1 = arith.constant 0 : i32
    return %arg0, %c0_i32, %c0_i32_0 : i32, i32, i32
  }
  func.func @transform_1(%arg0: i32) -> (i32, i32, i32) {
    %c0_i32 = arith.constant 0 : i32
    %c0_i32_0 = arith.constant 0 : i32
    %c0_i32_1 = arith.constant 0 : i32
    return %arg0, %c0_i32, %c0_i32_0 : i32, i32, i32
  }
  func.func @transform_2(%arg0: i32) -> (i32, i32) {
    %c0_i32 = arith.constant 0 : i32
    %c0_i32_0 = arith.constant 0 : i32
    %c0_i32_1 = arith.constant 0 : i32
    return %c0_i32, %c0_i32_0 : i32, i32
  }
  func.func @transform_3(%arg0: i32) -> (i32, i32) {
    %c0_i32 = arith.constant 0 : i32
    %c0_i32_0 = arith.constant 0 : i32
    %c0_i32_1 = arith.constant 0 : i32
    return %c0_i32, %c0_i32_0 : i32, i32
  }
  func.func @transform_4(%arg0: i32) -> (i32, i32, i32) {
    %c0_i32 = arith.constant 0 : i32
    %c0_i32_0 = arith.constant 0 : i32
    %c0_i32_1 = arith.constant 0 : i32
    return %arg0, %c0_i32, %c0_i32_0 : i32, i32, i32
  }
}

</mosaic_0001>

<llo_original>
// kernel: tpu_custom_call.1
$region0: #{tpu_custom_call.1}
  #allocation0 [shape = 'u32[]', space=smem, size = 0x4, offset = 0x4, fixed_abs, tag = 'smem constant byte address 0x4 - core index']
  #allocation1 [shape = 'u32[72,128]{1,0:T(1,128)}', space=vmem, size = 0x9000, scoped, tag = 'internal scratch']
  %s0 = inlined_call_operand.vmem [shape: f32[4,8,16], index: 0, kind: input, shape index: {}]
  %s1 = inlined_call_operand.vmem [shape: f32[4,8,1], index: 1, kind: input, shape index: {}]
  %s2 = inlined_call_operand.hbm [shape: bf16[976,128], index: 2, kind: input, shape index: {}]
  %s3 = inlined_call_operand.hbm [shape: f32[184,128], index: 3, kind: input, shape index: {}]
  %s4 = inlined_call_operand.vmem [shape: f32[4,8,1], index: 4, kind: output, shape index: {}]
  %s5 = sld [smem:[#allocation0]]
  $region57: #{tpu_custom_call.1} parent=0
    _
  %s7 = ssub.s32 1, %s5
  %s8 = scalar_select 0, %s7, %s5
  $region1: #{tpu_custom_call.1} parent=0
    #allocation2 [shape = 'u8[249856]{0}', space=vmem, size = 0x3d000, scoped, tag = 'input window, operand 2, single buffered']
    #allocation3 [shape = 's32[2]{0}', space=sflag, size = 0x8, scoped, tag = 'scoped memory for tpu_custom_call.1']
    #allocation4 [shape = 'u8[94208]{0}', space=vmem, size = 0x17000, scoped, tag = 'input window, operand 3, single buffered']
    #allocation5 [shape = 's32[1]{0}', space=sflag, size = 0x4, scoped, tag = 'scoped memory for tpu_custom_call.1']
    %9 = vsyncpa [#allocation3], 0
    %10 = vsyncpa [#allocation5], 0
    loop: start=0, step=1, limit=6
    $region2: #{tpu_custom_call.1} parent=1 // loop_pre_header
      _
    $region3: #{tpu_custom_call.1} parent=1 // loop_header
      %s12 = sphi 0, %s16
      %p13 = scmp.ge.s32.totalorder %s12, 6
      %s22 = sphi 0, %s24
      %s25 = sphi 0, %s22
      %s26 = sphi 0, %s25
      %s42 = sphi 0, %s26
      %s48 = sphi 0, %s50
      %s51 = sphi 0, %s48
      %s52 = sphi 0, %s51
      %s68 = sphi 0, %s52
      %s72 = sphi 0, %s72
      %s74 = sphi 0, %s72
      %s75 = sphi 0, %s74
      %s89 = sphi 0, %s75
      %s93 = sphi 0, %s93
      %s95 = sphi 0, %s93
      %s96 = sphi 0, %s95
      %s110 = sphi 0, %s96
      %s116 = sphi 0, %s118
      %s119 = sphi 0, %s116
      %s120 = sphi 0, %s119
      %s136 = sphi 0, %s120
    $region4: #{tpu_custom_call.1} parent=1 // loop_header_branch
      %15 = sbr.rel (%p13) target = $region8
    $region5: #{tpu_custom_call.1} parent=1 // loop_body
      %s17 = ssub.s32 %s12, 1
      %s18 = ssub.s32 %s12, 2
      %s19 = sadd.s32 %s12, 1
      %s20 = ssub.s32 %s12, %s19
      %p21 = scmp.eq.s32.totalorder %s20, 0
      %s23 = sadd.s32 %s22, 1
      %s24 = scalar_select %p21, %s22, %s23
      %p27 = pneg %p21
      %p28 = scmp.eq.s32.totalorder %s12, 3
      %p29 = por %p27, %p28
      %p30 = scmp.ne.s32.totalorder %s22, %s25
      %p31 = scmp.eq.s32.totalorder %s12, 0
      %p32 = por %p30, %p31
      %p33 = scmp.ne.s32.totalorder %s22, %s25
      %p34 = scmp.eq.s32.totalorder %s17, 3
      %p35 = por %p33, %p34
      %p36 = scmp.ne.s32.totalorder %s25, %s26
      %p37 = scmp.eq.s32.totalorder %s17, 0
      %p38 = por %p36, %p37
      %p39 = scmp.ne.s32.totalorder %s25, %s26
      %p40 = scmp.eq.s32.totalorder %s18, 3
      %p41 = por %p39, %p40
      %p43 = scmp.ne.s32.totalorder %s26, %s42
      %p44 = scmp.eq.s32.totalorder %s18, 0
      %p45 = por %p43, %p44
      %s46 = ssub.s32 %s12, %s19
      %p47 = scmp.eq.s32.totalorder %s46, 0
      %s49 = sadd.s32 %s48, 1
      %s50 = scalar_select %p47, %s48, %s49
      %p53 = pneg %p47
      %p54 = scmp.eq.s32.totalorder %s12, 3
      %p55 = por %p53, %p54
      %p56 = scmp.ne.s32.totalorder %s48, %s51
      %p57 = scmp.eq.s32.totalorder %s12, 0
      %p58 = por %p56, %p57
      %p59 = scmp.ne.s32.totalorder %s48, %s51
      %p60 = scmp.eq.s32.totalorder %s17, 3
      %p61 = por %p59, %p60
      %p62 = scmp.ne.s32.totalorder %s51, %s52
      %p63 = scmp.eq.s32.totalorder %s17, 0
      %p64 = por %p62, %p63
      %p65 = scmp.ne.s32.totalorder %s51, %s52
      %p66 = scmp.eq.s32.totalorder %s18, 3
      %p67 = por %p65, %p66
      %p69 = scmp.ne.s32.totalorder %s52, %s68
      %p70 = scmp.eq.s32.totalorder %s18, 0
      %p71 = por %p69, %p70
      %s73 = sadd.s32 %s72, 1
      %p76 = scmp.eq.s32.totalorder %s12, 3
      %p77 = scmp.ne.s32.totalorder %s72, %s74
      %p78 = scmp.eq.s32.totalorder %s12, 0
      %p79 = por %p77, %p78
      %p80 = scmp.ne.s32.totalorder %s72, %s74
      %p81 = scmp.eq.s32.totalorder %s17, 3
      %p82 = por %p80, %p81
      %p83 = scmp.ne.s32.totalorder %s74, %s75
      %p84 = scmp.eq.s32.totalorder %s17, 0
      %p85 = por %p83, %p84
      %p86 = scmp.ne.s32.totalorder %s74, %s75
      %p87 = scmp.eq.s32.totalorder %s18, 3
      %p88 = por %p86, %p87
      %p90 = scmp.ne.s32.totalorder %s75, %s89
      %p91 = scmp.eq.s32.totalorder %s18, 0
      %p92 = por %p90, %p91
      %s94 = sadd.s32 %s93, 1
      %p97 = scmp.eq.s32.totalorder %s12, 3
      %p98 = scmp.ne.s32.totalorder %s93, %s95
      %p99 = scmp.eq.s32.totalorder %s12, 0
      %p100 = por %p98, %p99
      %p101 = scmp.ne.s32.totalorder %s93, %s95
      %p102 = scmp.eq.s32.totalorder %s17, 3
      %p103 = por %p101, %p102
      %p104 = scmp.ne.s32.totalorder %s95, %s96
      %p105 = scmp.eq.s32.totalorder %s17, 0
      %p106 = por %p104, %p105
      %p107 = scmp.ne.s32.totalorder %s95, %s96
      %p108 = scmp.eq.s32.totalorder %s18, 3
      %p109 = por %p107, %p108
      %p111 = scmp.ne.s32.totalorder %s96, %s110
      %p112 = scmp.eq.s32.totalorder %s18, 0
      %p113 = por %p111, %p112
      %s114 = ssub.s32 %s12, %s19
      %p115 = scmp.eq.s32.totalorder %s114, 0
      %s117 = sadd.s32 %s116, 1
      %s118 = scalar_select %p115, %s116, %s117
      %p121 = pneg %p115
      %p122 = scmp.eq.s32.totalorder %s12, 3
      %p123 = por %p121, %p122
      %p124 = scmp.ne.s32.totalorder %s116, %s119
      %p125 = scmp.eq.s32.totalorder %s12, 0
      %p126 = por %p124, %p125
      %p127 = scmp.ne.s32.totalorder %s116, %s119
      %p128 = scmp.eq.s32.totalorder %s17, 3
      %p129 = por %p127, %p128
      %p130 = scmp.ne.s32.totalorder %s119, %s120
      %p131 = scmp.eq.s32.totalorder %s17, 0
      %p132 = por %p130, %p131
      %p133 = scmp.ne.s32.totalorder %s119, %s120
      %p134 = scmp.eq.s32.totalorder %s18, 3
      %p135 = por %p133, %p134
      %p137 = scmp.ne.s32.totalorder %s120, %s136
      %p138 = scmp.eq.s32.totalorder %s18, 0
      %p139 = por %p137, %p138
      %p140 = scmp.le.s32.totalorder 1, %s12
      %p141 = scmp.lt.s32.totalorder %s12, 5
      %p142 = pnand %p140, %p141
      %p143 = pneg %p142
      // Predicated region
      $region9: #{tpu_custom_call.1} parent=5 // pred_check
        _
      $region10: #{tpu_custom_call.1} parent=5 // pred_check_branch
        %145 = sbr.rel (%p142) target = $region12
      $region11: #{tpu_custom_call.1} parent=5 // pred_region
        %s146 = ssub.s32 %s12, 1
        // Predicated region
        $region13: #{tpu_custom_call.1} parent=11 // pred_check
          %p147 = pneg %p85
        $region14: #{tpu_custom_call.1} parent=11 // pred_check_branch
          %149 = sbr.rel (%p147) target = $region16
        $region15: #{tpu_custom_call.1} parent=11 // pred_region
          %151 = vsyncadd [#allocation3], 0
          %s152 = sshll.u32 %s2, 4
          %s153 = int_to_ptr.hbm [resolvable:$true] %s152
          %s154 = sshll.u32 [#allocation2], 4
          %s155 = int_to_ptr.vmem [resolvable:$true] %s154
          %160 = dma.hbm_to_vmem [thread:$0]  %s153, 7808, %s155, [#allocation3], 64, 64, 4
        $region16: #{tpu_custom_call.1} parent=11 // pred_fallthru
          _
        // Predicated region
        $region17: #{tpu_custom_call.1} parent=11 // pred_check
          %p161 = pneg %p106
        $region18: #{tpu_custom_call.1} parent=11 // pred_check_branch
          %163 = sbr.rel (%p161) target = $region20
        $region19: #{tpu_custom_call.1} parent=11 // pred_region
          %165 = vsyncadd [#allocation5], 0
          %s166 = sshll.u32 %s3, 4
          %s167 = int_to_ptr.hbm [resolvable:$true] %s166
          %s168 = sshll.u32 [#allocation4], 4
          %s169 = int_to_ptr.vmem [resolvable:$true] %s168
          %174 = dma.hbm_to_vmem [thread:$0]  %s167, 2944, %s169, [#allocation5], 128, 128, 8
        $region20: #{tpu_custom_call.1} parent=11 // pred_fallthru
          _
      $region12: #{tpu_custom_call.1} parent=5 // pred_fallthru
        _
      %p175 = scmp.lt.s32.totalorder %s12, 4
      // Predicated region
      $region21: #{tpu_custom_call.1} parent=5 // pred_check
        %p176 = pneg %p175
      $region22: #{tpu_custom_call.1} parent=5 // pred_check_branch
        %178 = sbr.rel (%p176) target = $region24
      $region23: #{tpu_custom_call.1} parent=5 // pred_region
        // Predicated region
        $region25: #{tpu_custom_call.1} parent=23 // pred_check
          %p179 = pneg %p32
        $region26: #{tpu_custom_call.1} parent=23 // pred_check_branch
          %181 = sbr.rel (%p179) target = $region28
        $region27: #{tpu_custom_call.1} parent=23 // pred_region
          %p182 = scmp.lt.s32.totalorder %s12, 3
          %s183 = scalar_select %p182, %s12, 3
          %s184 = smul.addr %s183, 8
          %s185 = scalar_lea.vmem %s0, %s184
        $region28: #{tpu_custom_call.1} parent=23 // pred_fallthru
          _
        // Predicated region
        $region29: #{tpu_custom_call.1} parent=23 // pred_check
          %p186 = pneg %p58
        $region30: #{tpu_custom_call.1} parent=23 // pred_check_branch
          %188 = sbr.rel (%p186) target = $region32
        $region31: #{tpu_custom_call.1} parent=23 // pred_region
          %p189 = scmp.lt.s32.totalorder %s12, 3
          %s190 = scalar_select %p189, %s12, 3
          %s191 = smul.addr %s190, 8
          %s192 = scalar_lea.vmem %s1, %s191
        $region32: #{tpu_custom_call.1} parent=23 // pred_fallthru
          _
      $region24: #{tpu_custom_call.1} parent=5 // pred_fallthru
        _
      %p193 = scmp.le.s32.totalorder 1, %s12
      %p194 = scmp.lt.s32.totalorder %s12, 5
      %p195 = pnand %p193, %p194
      %p196 = pneg %p195
      // Predicated region
      $region33: #{tpu_custom_call.1} parent=5 // pred_check
        _
      $region34: #{tpu_custom_call.1} parent=5 // pred_check_branch
        %198 = sbr.rel (%p195) target = $region36
      $region35: #{tpu_custom_call.1} parent=5 // pred_region
        %s199 = ssub.s32 %s12, 1
        // Predicated region
        $region37: #{tpu_custom_call.1} parent=35 // pred_check
          %p200 = pneg %p85
        $region38: #{tpu_custom_call.1} parent=35 // pred_check_branch
          %202 = sbr.rel (%p200) target = $region40
        $region39: #{tpu_custom_call.1} parent=35 // pred_region
          %204 = dma.done [#allocation3], 7808
        $region40: #{tpu_custom_call.1} parent=35 // pred_fallthru
          _
        // Predicated region
        $region41: #{tpu_custom_call.1} parent=35 // pred_check
          %p205 = pneg %p106
        $region42: #{tpu_custom_call.1} parent=35 // pred_check_branch
          %207 = sbr.rel (%p205) target = $region44
        $region43: #{tpu_custom_call.1} parent=35 // pred_region
          %209 = dma.done [#allocation5], 2944
        $region44: #{tpu_custom_call.1} parent=35 // pred_fallthru
          _
        %p210 = scmp.lt.s32.totalorder %s17, 3
        %s211 = scalar_select %p210, %s17, 3
        %s212 = smul.addr %s211, 8
        %s213 = scalar_lea.vmem %s0, %s212
        %p214 = pneg %p38
        %p215 = pneg %p35
        %p216 = scmp.lt.s32.totalorder %s17, 3
        %s217 = scalar_select %p216, %s17, 3
        %s218 = smul.addr %s217, 8
        %s219 = scalar_lea.vmem %s1, %s218
        %p220 = pneg %p64
        %p221 = pneg %p61
        %p222 = pneg %p85
        %p223 = pneg %p82
        %p224 = pneg %p106
        %p225 = pneg %p103
        %p226 = pneg %p132
        %p227 = pneg %p129
        %p228 = scmp.lt.s32.totalorder %s17, 3
        %s229 = scalar_select %p228, %s17, 3
        %s230 = smul.addr %s229, 8
        %s231 = scalar_lea.vmem %s4, %s230
        %p232 = scmp.lt.s32.totalorder %s17, 3
        %s233 = scalar_select %p232, %s17, 3
        %s234 = smul.addr %s233, 8
        %s235 = scalar_lea.vmem %s0, %s234
        %p236 = scmp.lt.s32.totalorder %s17, 3
        %s237 = scalar_select %p236, %s17, 3
        %s238 = smul.addr %s237, 8
        %s239 = scalar_lea.vmem %s1, %s238
        %p240 = scmp.lt.s32.totalorder %s17, 3
        %s241 = scalar_select %p240, %s17, 3
        %s242 = smul.addr %s241, 8
        %s243 = scalar_lea.vmem %s4, %s242
        %v245 = vld [vmem:[%s235] sm:$0xff]
        %v246 = vpack.c.bf16 %v245, %v245
        %v247 = vld [vmem:[%s239] sm:$0xff]
        %v248 = vld [vmem:[#allocation2] sm:$0xf]
        %v249 = vld [vmem:[#allocation2 + $0x4] sm:$0xf]
        %v250 = vld [vmem:[#allocation4] sm:$0x1]
        %v251 = vperm.slane %v250, 0
        %v254 = vunpack.c.l.b16 %v248
        %v255 = vunpack.c.l.b16 %v249
        %v256 = vpack.c.b16 %v255, %v254
        %vm258 = vcmask 130048
        %v260 = vsel %vm258, %v246, 0
        %262 = vmatpush.bf16.msra.mxu0 0
        %263 = vmatpush.bf16.msra.mxu0 0
        %264 = vmatpush.bf16.msra.mxu0 0
        %265 = vmatpush.bf16.msra.mxu0 0
        %266 = vmatpush.bf16.msra.mxu0 0
        %267 = vmatpush.bf16.msra.mxu0 0
        %268 = vmatpush.bf16.msra.mxu0 0
        %269 = vmatpush.bf16.msra.mxu0 %v256
        %270 = vmatmul.bf16.gmra.mxu0 %v260
        %v271 = vpop.f32.mrf.mxu0
        %v272 = vadd.f32 %v251, %v271
        %v273 = vpop.f32.mrf.mxu0
        %274 = vdwg.mxu0
        %v275 = vmax.f32 %v272, 0.0
        %v276 = vpack.c.bf16 %v275, %v275
        %v277 = vld [vmem:[#allocation2 + $0x48] sm:$0xf]
        %v278 = vld [vmem:[#allocation2 + $0x4c] sm:$0xf]
        %v279 = vld [vmem:[#allocation2 + $0x50] sm:$0xf]
        %v280 = vld [vmem:[#allocation2 + $0x54] sm:$0xf]
        %v281 = vld [vmem:[#allocation2 + $0x58] sm:$0xf]
        %v282 = vld [vmem:[#allocation2 + $0x5c] sm:$0xf]
        %v283 = vld [vmem:[#allocation2 + $0x60] sm:$0xf]
        %v284 = vld [vmem:[#allocation2 + $0x64] sm:$0xf]
        %v285 = vld [vmem:[#allocation2 + $0x68] sm:$0xf]
        %v286 = vld [vmem:[#allocation2 + $0x6c] sm:$0xf]
        %v287 = vld [vmem:[#allocation2 + $0x70] sm:$0xf]
        %v288 = vld [vmem:[#allocation2 + $0x74] sm:$0xf]
        %v289 = vld [vmem:[#allocation2 + $0x78] sm:$0xf]
        %v290 = vld [vmem:[#allocation2 + $0x7c] sm:$0xf]
        %v291 = vld [vmem:[#allocation2 + $0x80] sm:$0xf]
        %v292 = vld [vmem:[#allocation2 + $0x84] sm:$0xf]
        %v293 = vld [vmem:[#allocation4 + $0x38] sm:$0x1]
        %v294 = vperm.slane %v293, 0
        %v311 = vunpack.c.l.b16 %v277
        %v312 = vunpack.c.l.b16 %v278
        %v313 = vunpack.c.l.b16 %v279
        %v314 = vunpack.c.l.b16 %v280
        %v315 = vunpack.c.l.b16 %v281
        %v316 = vunpack.c.l.b16 %v282
        %v317 = vunpack.c.l.b16 %v283
        %v318 = vunpack.c.l.b16 %v284
        %v319 = vunpack.c.l.b16 %v285
        %v320 = vunpack.c.l.b16 %v286
        %v321 = vunpack.c.l.b16 %v287
        %v322 = vunpack.c.l.b16 %v288
        %v323 = vunpack.c.l.b16 %v289
        %v324 = vunpack.c.l.b16 %v290
        %v325 = vunpack.c.l.b16 %v291
        %v326 = vunpack.c.l.b16 %v292
        %v327 = vpack.c.b16 %v312, %v311
        %v328 = vpack.c.b16 %v314, %v313
        %v329 = vpack.c.b16 %v316, %v315
        %v330 = vpack.c.b16 %v318, %v317
        %v331 = vpack.c.b16 %v320, %v319
        %v332 = vpack.c.b16 %v322, %v321
        %v333 = vpack.c.b16 %v324, %v323
        %v334 = vpack.c.b16 %v326, %v325
        %343 = vmatpush.bf16.msra.mxu0 %v334
        %344 = vmatpush.bf16.msra.mxu0 %v333
        %345 = vmatpush.bf16.msra.mxu0 %v332
        %346 = vmatpush.bf16.msra.mxu0 %v331
        %347 = vmatpush.bf16.msra.mxu0 %v330
        %348 = vmatpush.bf16.msra.mxu0 %v329
        %349 = vmatpush.bf16.msra.mxu0 %v328
        %350 = vmatpush.bf16.msra.mxu0 %v327
        %351 = vmatmul.bf16.gmra.mxu0 %v276
        %v352 = vpop.f32.mrf.mxu0
        %v353 = vadd.f32 %v294, %v352
        %v354 = vpop.f32.mrf.mxu0
        %355 = vdwg.mxu0
        %v356 = vld [vmem:[#allocation2 + $0x88] sm:$0xf]
        %v357 = vld [vmem:[#allocation2 + $0x8c] sm:$0xf]
        %v358 = vld [vmem:[#allocation2 + $0x90] sm:$0xf]
        %v359 = vld [vmem:[#allocation2 + $0x94] sm:$0xf]
        %361 = vrot.lane.b32.xlu0 %v353, 96
        %v362 = vpop.permute.xlu0 %361
        %vm363 = vcmask 64512
        %v364 = vsel %vm363, %v353, 0
        %v366 = vsel %vm363, %v362, 0
        %368 = vmatpush.xpose.msra.mxu0 0.0
        %369 = vmatpush.xpose.msra.mxu0 0.0
        %370 = vmatpush.xpose.msra.mxu0 0.0
        %371 = vmatpush.xpose.msra.mxu0 0.0
        %372 = vmatpush.xpose.msra.mxu0 0.0
        %373 = vmatpush.xpose.msra.mxu0 0.0
        %374 = vmatpush.xpose.msra.mxu0 0.0
        %375 = vmatpush.xpose.msra.mxu0 0.0
        %376 = vmatpush.xpose.msra.mxu0 0.0
        %377 = vmatpush.xpose.msra.mxu0 0.0
        %378 = vmatpush.xpose.msra.mxu0 0.0
        %379 = vmatpush.xpose.msra.mxu0 0.0
        %380 = vmatpush.xpose.msra.mxu0 0.0
        %381 = vmatpush.xpose.msra.mxu0 0.0
        %382 = vmatpush.xpose.msra.mxu0 0.0
        %383 = vmatpush.xpose.msra.mxu0 %v366
        %384 = vmatmul.f32.gmra.mxu0 %v364
        %v385 = vpop.f32.mrf.mxu0
        %v386 = vadd.f32 0.0, %v385
        %387 = vdwg.mxu0
        %v388 = vmul.f32 %v386, 0.35355338
        %v389 = vsel %vm363, %v388, -inf
        %390 = vmax.xlane.f32.xlu0 %v389
        %v391 = vpop.xlane.xlu0 %390
        %v392 = vsub.f32 %v388, %v391
        %v393 = vmul.f32 %v392, 1.442695
        %v394 = vpow.pop %v393
        %v395 = vsel %vm363, %v394, 0.0
        %396 = vadd.xlane.f32.xlu0 %v395
        %v397 = vpop.xlane.xlu0 %396
        %v398 = vrcp.pop %v397
        %v399 = vmul.f32 %v394, %v398
        %400 = vrot.lane.b32.xlu0 %v353, 64
        %v401 = vpop.permute.xlu0 %400
        %v404 = vsel %vm363, %v399, 0
        %406 = vmatpush.msra.mxu0 0.0
        %407 = vmatpush.msra.mxu0 0.0
        %408 = vmatpush.msra.mxu0 0.0
        %409 = vmatpush.msra.mxu0 0.0
        %410 = vmatpush.msra.mxu0 0.0
        %411 = vmatpush.msra.mxu0 0.0
        %412 = vmatpush.msra.mxu0 0.0
        %413 = vmatpush.msra.mxu0 0.0
        %414 = vmatpush.msra.mxu0 0.0
        %415 = vmatpush.msra.mxu0 0.0
        %416 = vmatpush.msra.mxu0 0.0
        %417 = vmatpush.msra.mxu0 0.0
        %418 = vmatpush.msra.mxu0 0.0
        %419 = vmatpush.msra.mxu0 0.0
        %420 = vmatpush.msra.mxu0 0.0
        %421 = vmatpush.msra.mxu0 %v401
        %422 = vmatmul.f32.gmra.mxu0 %v404
        %v423 = vpop.f32.mrf.mxu0
        %v424 = vadd.f32 0.0, %v423
        %425 = vdwg.mxu0
        %v426 = vpack.c.bf16 %v424, %v424
        %427 = vrot.lane.b32.xlu0 %v353, 120
        %v428 = vpop.permute.xlu0 %427
        %429 = vrot.lane.b32.xlu0 %v353, 88
        %v430 = vpop.permute.xlu0 %429
        %v431 = vsel %vm363, %v428, 0
        %v433 = vsel %vm363, %v430, 0
        %435 = vmatpush.xpose.msra.mxu0 0.0
        %436 = vmatpush.xpose.msra.mxu0 0.0
        %437 = vmatpush.xpose.msra.mxu0 0.0
        %438 = vmatpush.xpose.msra.mxu0 0.0
        %439 = vmatpush.xpose.msra.mxu0 0.0
        %440 = vmatpush.xpose.msra.mxu0 0.0
        %441 = vmatpush.xpose.msra.mxu0 0.0
        %442 = vmatpush.xpose.msra.mxu0 0.0
        %443 = vmatpush.xpose.msra.mxu0 0.0
        %444 = vmatpush.xpose.msra.mxu0 0.0
        %445 = vmatpush.xpose.msra.mxu0 0.0
        %446 = vmatpush.xpose.msra.mxu0 0.0
        %447 = vmatpush.xpose.msra.mxu0 0.0
        %448 = vmatpush.xpose.msra.mxu0 0.0
        %449 = vmatpush.xpose.msra.mxu0 0.0
        %450 = vmatpush.xpose.msra.mxu0 %v433
        %451 = vmatmul.f32.gmra.mxu0 %v431
        %v452 = vpop.f32.mrf.mxu0
        %v453 = vadd.f32 0.0, %v452
        %454 = vdwg.mxu0
        %v455 = vmul.f32 %v453, 0.35355338
        %v456 = vsel %vm363, %v455, -inf
        %457 = vmax.xlane.f32.xlu0 %v456
        %v458 = vpop.xlane.xlu0 %457
        %v459 = vsub.f32 %v455, %v458
        %v460 = vmul.f32 %v459, 1.442695
        %v461 = vpow.pop %v460
        %v462 = vsel %vm363, %v461, 0.0
        %463 = vadd.xlane.f32.xlu0 %v462
        %v464 = vpop.xlane.xlu0 %463
        %v465 = vrcp.pop %v464
        %v466 = vmul.f32 %v461, %v465
        %467 = vrot.lane.b32.xlu0 %v353, 56
        %v468 = vpop.permute.xlu0 %467
        %v471 = vsel %vm363, %v466, 0
        %473 = vmatpush.msra.mxu0 0.0
        %474 = vmatpush.msra.mxu0 0.0
        %475 = vmatpush.msra.mxu0 0.0
        %476 = vmatpush.msra.mxu0 0.0
        %477 = vmatpush.msra.mxu0 0.0
        %478 = vmatpush.msra.mxu0 0.0
        %479 = vmatpush.msra.mxu0 0.0
        %480 = vmatpush.msra.mxu0 0.0
        %481 = vmatpush.msra.mxu0 0.0
        %482 = vmatpush.msra.mxu0 0.0
        %483 = vmatpush.msra.mxu0 0.0
        %484 = vmatpush.msra.mxu0 0.0
        %485 = vmatpush.msra.mxu0 0.0
        %486 = vmatpush.msra.mxu0 0.0
        %487 = vmatpush.msra.mxu0 0.0
        %488 = vmatpush.msra.mxu0 %v468
        %489 = vmatmul.f32.gmra.mxu0 %v471
        %v490 = vpop.f32.mrf.mxu0
        %v491 = vadd.f32 0.0, %v490
        %492 = vdwg.mxu0
        %v493 = vpack.c.bf16 %v491, %v491
        %v495 = vsel %vm363, %v493, 0
        %vm497 = vcmask 1043456
        %v499 = vsel %vm497, %v357, 0
        %501 = vmatpush.bf16.msra.mxu0 0
        %502 = vmatpush.bf16.msra.mxu0 0
        %503 = vmatpush.bf16.msra.mxu0 0
        %504 = vmatpush.bf16.msra.mxu0 0
        %505 = vmatpush.bf16.msra.mxu0 0
        %506 = vmatpush.bf16.msra.mxu0 0
        %507 = vmatpush.bf16.msra.mxu0 0
        %508 = vmatpush.bf16.msra.mxu0 %v499
        %509 = vmatmul.bf16.gmra.mxu0 %v495
        %v510 = vpop.f32.mrf.mxu0
        %v511 = vadd.f32 0.0, %v510
        %v512 = vpop.f32.mrf.mxu0
        %513 = vdwg.mxu0
        %v515 = vsel %vm363, %v426, 0
        %v518 = vsel %vm497, %v356, 0
        %520 = vmatpush.bf16.msra.mxu0 0
        %521 = vmatpush.bf16.msra.mxu0 0
        %522 = vmatpush.bf16.msra.mxu0 0
        %523 = vmatpush.bf16.msra.mxu0 0
        %524 = vmatpush.bf16.msra.mxu0 0
        %525 = vmatpush.bf16.msra.mxu0 0
        %526 = vmatpush.bf16.msra.mxu0 0
        %527 = vmatpush.bf16.msra.mxu0 %v518
        %528 = vmatmul.bf16.gmra.mxu0 %v515
        %v529 = vpop.f32.mrf.mxu0
        %v530 = vadd.f32 %v511, %v529
        %v531 = vpop.f32.mrf.mxu0
        %532 = vdwg.mxu0
        %533 = vrot.lane.b32.xlu0 %v353, 112
        %v534 = vpop.permute.xlu0 %533
        %535 = vrot.lane.b32.xlu0 %v353, 80
        %v536 = vpop.permute.xlu0 %535
        %v537 = vsel %vm363, %v534, 0
        %v539 = vsel %vm363, %v536, 0
        %541 = vmatpush.xpose.msra.mxu0 0.0
        %542 = vmatpush.xpose.msra.mxu0 0.0
        %543 = vmatpush.xpose.msra.mxu0 0.0
        %544 = vmatpush.xpose.msra.mxu0 0.0
        %545 = vmatpush.xpose.msra.mxu0 0.0
        %546 = vmatpush.xpose.msra.mxu0 0.0
        %547 = vmatpush.xpose.msra.mxu0 0.0
        %548 = vmatpush.xpose.msra.mxu0 0.0
        %549 = vmatpush.xpose.msra.mxu0 0.0
        %550 = vmatpush.xpose.msra.mxu0 0.0
        %551 = vmatpush.xpose.msra.mxu0 0.0
        %552 = vmatpush.xpose.msra.mxu0 0.0
        %553 = vmatpush.xpose.msra.mxu0 0.0
        %554 = vmatpush.xpose.msra.mxu0 0.0
        %555 = vmatpush.xpose.msra.mxu0 0.0
        %556 = vmatpush.xpose.msra.mxu0 %v539
        %557 = vmatmul.f32.gmra.mxu0 %v537
        %v558 = vpop.f32.mrf.mxu0
        %v559 = vadd.f32 0.0, %v558
        %560 = vdwg.mxu0
        %v561 = vmul.f32 %v559, 0.35355338
        %v562 = vsel %vm363, %v561, -inf
        %563 = vmax.xlane.f32.xlu0 %v562
        %v564 = vpop.xlane.xlu0 %563
        %v565 = vsub.f32 %v561, %v564
        %v566 = vmul.f32 %v565, 1.442695
        %v567 = vpow.pop %v566
        %v568 = vsel %vm363, %v567, 0.0
        %569 = vadd.xlane.f32.xlu0 %v568
        %v570 = vpop.xlane.xlu0 %569
        %v571 = vrcp.pop %v570
        %v572 = vmul.f32 %v567, %v571
        %573 = vrot.lane.b32.xlu0 %v353, 48
        %v574 = vpop.permute.xlu0 %573
        %v577 = vsel %vm363, %v572, 0
        %579 = vmatpush.msra.mxu0 0.0
        %580 = vmatpush.msra.mxu0 0.0
        %581 = vmatpush.msra.mxu0 0.0
        %582 = vmatpush.msra.mxu0 0.0
        %583 = vmatpush.msra.mxu0 0.0
        %584 = vmatpush.msra.mxu0 0.0
        %585 = vmatpush.msra.mxu0 0.0
        %586 = vmatpush.msra.mxu0 0.0
        %587 = vmatpush.msra.mxu0 0.0
        %588 = vmatpush.msra.mxu0 0.0
        %589 = vmatpush.msra.mxu0 0.0
        %590 = vmatpush.msra.mxu0 0.0
        %591 = vmatpush.msra.mxu0 0.0
        %592 = vmatpush.msra.mxu0 0.0
        %593 = vmatpush.msra.mxu0 0.0
        %594 = vmatpush.msra.mxu0 %v574
        %595 = vmatmul.f32.gmra.mxu0 %v577
        %v596 = vpop.f32.mrf.mxu0
        %v597 = vadd.f32 0.0, %v596
        %598 = vdwg.mxu0
        %v599 = vpack.c.bf16 %v597, %v597
        %v601 = vsel %vm363, %v599, 0
        %v604 = vsel %vm497, %v358, 0
        %606 = vmatpush.bf16.msra.mxu0 0
        %607 = vmatpush.bf16.msra.mxu0 0
        %608 = vmatpush.bf16.msra.mxu0 0
        %609 = vmatpush.bf16.msra.mxu0 0
        %610 = vmatpush.bf16.msra.mxu0 0
        %611 = vmatpush.bf16.msra.mxu0 0
        %612 = vmatpush.bf16.msra.mxu0 0
        %613 = vmatpush.bf16.msra.mxu0 %v604
        %614 = vmatmul.bf16.gmra.mxu0 %v601
        %v615 = vpop.f32.mrf.mxu0
        %v616 = vadd.f32 0.0, %v615
        %v617 = vpop.f32.mrf.mxu0
        %618 = vdwg.mxu0
        %v619 = vadd.f32 %v530, %v616
        %620 = vrot.lane.b32.xlu0 %v353, 104
        %v621 = vpop.permute.xlu0 %620
        %622 = vrot.lane.b32.xlu0 %v353, 72
        %v623 = vpop.permute.xlu0 %622
        %v624 = vsel %vm363, %v621, 0
        %v626 = vsel %vm363, %v623, 0
        %628 = vmatpush.xpose.msra.mxu0 0.0
        %629 = vmatpush.xpose.msra.mxu0 0.0
        %630 = vmatpush.xpose.msra.mxu0 0.0
        %631 = vmatpush.xpose.msra.mxu0 0.0
        %632 = vmatpush.xpose.msra.mxu0 0.0
        %633 = vmatpush.xpose.msra.mxu0 0.0
        %634 = vmatpush.xpose.msra.mxu0 0.0
        %635 = vmatpush.xpose.msra.mxu0 0.0
        %636 = vmatpush.xpose.msra.mxu0 0.0
        %637 = vmatpush.xpose.msra.mxu0 0.0
        %638 = vmatpush.xpose.msra.mxu0 0.0
        %639 = vmatpush.xpose.msra.mxu0 0.0
        %640 = vmatpush.xpose.msra.mxu0 0.0
        %641 = vmatpush.xpose.msra.mxu0 0.0
        %642 = vmatpush.xpose.msra.mxu0 0.0
        %643 = vmatpush.xpose.msra.mxu0 %v626
        %644 = vmatmul.f32.gmra.mxu0 %v624
        %v645 = vpop.f32.mrf.mxu0
        %v646 = vadd.f32 0.0, %v645
        %647 = vdwg.mxu0
        %v648 = vmul.f32 %v646, 0.35355338
        %v649 = vsel %vm363, %v648, -inf
        %650 = vmax.xlane.f32.xlu0 %v649
        %v651 = vpop.xlane.xlu0 %650
        %v652 = vsub.f32 %v648, %v651
        %v653 = vmul.f32 %v652, 1.442695
        %v654 = vpow.pop %v653
        %v655 = vsel %vm363, %v654, 0.0
        %656 = vadd.xlane.f32.xlu0 %v655
        %v657 = vpop.xlane.xlu0 %656
        %v658 = vrcp.pop %v657
        %v659 = vmul.f32 %v654, %v658
        %660 = vrot.lane.b32.xlu0 %v353, 40
        %v661 = vpop.permute.xlu0 %660
        %v664 = vsel %vm363, %v659, 0
        %666 = vmatpush.msra.mxu0 0.0
        %667 = vmatpush.msra.mxu0 0.0
        %668 = vmatpush.msra.mxu0 0.0
        %669 = vmatpush.msra.mxu0 0.0
        %670 = vmatpush.msra.mxu0 0.0
        %671 = vmatpush.msra.mxu0 0.0
        %672 = vmatpush.msra.mxu0 0.0
        %673 = vmatpush.msra.mxu0 0.0
        %674 = vmatpush.msra.mxu0 0.0
        %675 = vmatpush.msra.mxu0 0.0
        %676 = vmatpush.msra.mxu0 0.0
        %677 = vmatpush.msra.mxu0 0.0
        %678 = vmatpush.msra.mxu0 0.0
        %679 = vmatpush.msra.mxu0 0.0
        %680 = vmatpush.msra.mxu0 0.0
        %681 = vmatpush.msra.mxu0 %v661
        %682 = vmatmul.f32.gmra.mxu0 %v664
        %v683 = vpop.f32.mrf.mxu0
        %v684 = vadd.f32 0.0, %v683
        %685 = vdwg.mxu0
        %v686 = vpack.c.bf16 %v684, %v684
        %v688 = vsel %vm363, %v686, 0
        %v691 = vsel %vm497, %v359, 0
        %693 = vmatpush.bf16.msra.mxu0 0
        %694 = vmatpush.bf16.msra.mxu0 0
        %695 = vmatpush.bf16.msra.mxu0 0
        %696 = vmatpush.bf16.msra.mxu0 0
        %697 = vmatpush.bf16.msra.mxu0 0
        %698 = vmatpush.bf16.msra.mxu0 0
        %699 = vmatpush.bf16.msra.mxu0 0
        %700 = vmatpush.bf16.msra.mxu0 %v691
        %701 = vmatmul.bf16.gmra.mxu0 %v688
        %v702 = vpop.f32.mrf.mxu0
        %v703 = vadd.f32 0.0, %v702
        %v704 = vpop.f32.mrf.mxu0
        %705 = vdwg.mxu0
        %v706 = vadd.f32 %v619, %v703
        %v707 = vld [vmem:[#allocation4 + $0x40] sm:$0x1]
        %v708 = vperm.slane %v707, 0
        %v709 = vadd.f32 %v706, %v708
        %v710 = vadd.f32 %v275, %v709
        %v711 = vld [vmem:[#allocation4 + $0x48] sm:$0x1]
        %v712 = vld [vmem:[#allocation4 + $0x50] sm:$0x1]
        %713 = vadd.xlane.f32.xlu0 %v710
        %v714 = vpop.xlane.xlu0 %713
        %v715 = vmul.f32 %v714, 0.03125
        %v716 = vmul.f32 %v710, %v710
        %717 = vadd.xlane.f32.xlu0 %v716
        %v718 = vpop.xlane.xlu0 %717
        %v719 = vmul.f32 %v718, 0.03125
        %v720 = vmul.f32 %v715, %v715
        %v721 = vsub.f32 %v719, %v720
        %v722 = vsub.f32 %v710, %v715
        %v723 = vadd.f32 %v721, 1e-05
        %v724 = vrsqrt.pop %v723
        %v725 = vmul.f32 %v724, %v723
        %v726 = vmul.f32 %v725, %v724
        %v727 = vmul.f32 0.5, %v726
        %v728 = vsub.f32 1.5, %v727
        %v729 = vmul.f32 %v724, %v728
        %vm730 = vweird.f32 %v723
        %vm731 = vweird.f32 %v724
        %vm732 = vmor %vm730, %vm731
        %v733 = vsel %vm732, %v724, %v729
        %v734 = vmul.f32 %v722, %v733
        %v735 = vperm.slane %v711, 0
        %v736 = vmul.f32 %v734, %v735
        %v737 = vperm.slane %v712, 0
        %v738 = vadd.f32 %v736, %v737
        %v739 = vpack.c.bf16 %v738, %v738
        %v740 = vld [vmem:[#allocation2 + $0x98] sm:$0xf]
        %v741 = vld [vmem:[#allocation2 + $0x9c] sm:$0xf]
        %v742 = vld [vmem:[#allocation2 + $0xa0] sm:$0xf]
        %v743 = vld [vmem:[#allocation2 + $0xa4] sm:$0xf]
        %v744 = vld [vmem:[#allocation2 + $0xa8] sm:$0xf]
        %v745 = vld [vmem:[#allocation2 + $0xac] sm:$0xf]
        %v746 = vld [vmem:[#allocation2 + $0xb0] sm:$0xf]
        %v747 = vld [vmem:[#allocation2 + $0xb4] sm:$0xf]
        %v748 = vld [vmem:[#allocation2 + $0xb8] sm:$0xf]
        %v749 = vld [vmem:[#allocation2 + $0xbc] sm:$0xf]
        %v750 = vld [vmem:[#allocation2 + $0xc0] sm:$0xf]
        %v751 = vld [vmem:[#allocation2 + $0xc4] sm:$0xf]
        %v752 = vld [vmem:[#allocation2 + $0xc8] sm:$0xf]
        %v753 = vld [vmem:[#allocation2 + $0xcc] sm:$0xf]
        %v754 = vld [vmem:[#allocation2 + $0xd0] sm:$0xf]
        %v755 = vld [vmem:[#allocation2 + $0xd4] sm:$0xf]
        %v756 = vld [vmem:[#allocation4 + $0x58] sm:$0x1]
        %v757 = vperm.slane %v756, 0
        %v774 = vunpack.c.l.b16 %v740
        %v775 = vunpack.c.l.b16 %v741
        %v776 = vunpack.c.l.b16 %v742
        %v777 = vunpack.c.l.b16 %v743
        %v778 = vunpack.c.l.b16 %v744
        %v779 = vunpack.c.l.b16 %v745
        %v780 = vunpack.c.l.b16 %v746
        %v781 = vunpack.c.l.b16 %v747
        %v782 = vunpack.c.l.b16 %v748
        %v783 = vunpack.c.l.b16 %v749
        %v784 = vunpack.c.l.b16 %v750
        %v785 = vunpack.c.l.b16 %v751
        %v786 = vunpack.c.l.b16 %v752
        %v787 = vunpack.c.l.b16 %v753
        %v788 = vunpack.c.l.b16 %v754
        %v789 = vunpack.c.l.b16 %v755
        %v790 = vpack.c.b16 %v775, %v774
        %v791 = vpack.c.b16 %v777, %v776
        %v792 = vpack.c.b16 %v779, %v778
        %v793 = vpack.c.b16 %v781, %v780
        %v794 = vpack.c.b16 %v783, %v782
        %v795 = vpack.c.b16 %v785, %v784
        %v796 = vpack.c.b16 %v787, %v786
        %v797 = vpack.c.b16 %v789, %v788
        %806 = vmatpush.bf16.msra.mxu0 %v797
        %807 = vmatpush.bf16.msra.mxu0 %v796
        %808 = vmatpush.bf16.msra.mxu0 %v795
        %809 = vmatpush.bf16.msra.mxu0 %v794
        %810 = vmatpush.bf16.msra.mxu0 %v793
        %811 = vmatpush.bf16.msra.mxu0 %v792
        %812 = vmatpush.bf16.msra.mxu0 %v791
        %813 = vmatpush.bf16.msra.mxu0 %v790
        %814 = vmatmul.bf16.gmra.mxu0 %v739
        %v815 = vpop.f32.mrf.mxu0
        %v816 = vadd.f32 %v757, %v815
        %v817 = vpop.f32.mrf.mxu0
        %818 = vdwg.mxu0
        %v819 = vmax.f32 %v816, 0.0
        %v820 = vpack.c.bf16 %v819, %v819
        %v821 = vld [vmem:[#allocation2 + $0xd8] sm:$0xf]
        %v822 = vld [vmem:[#allocation2 + $0xdc] sm:$0xf]
        %v823 = vld [vmem:[#allocation2 + $0xe0] sm:$0xf]
        %v824 = vld [vmem:[#allocation2 + $0xe4] sm:$0xf]
        %v825 = vld [vmem:[#allocation2 + $0xe8] sm:$0xf]
        %v826 = vld [vmem:[#allocation2 + $0xec] sm:$0xf]
        %v827 = vld [vmem:[#allocation2 + $0xf0] sm:$0xf]
        %v828 = vld [vmem:[#allocation2 + $0xf4] sm:$0xf]
        %v829 = vld [vmem:[#allocation2 + $0xf8] sm:$0xf]
        %v830 = vld [vmem:[#allocation2 + $0xfc] sm:$0xf]
        %v831 = vld [vmem:[#allocation2 + $0x100] sm:$0xf]
        %v832 = vld [vmem:[#allocation2 + $0x104] sm:$0xf]
        %v833 = vld [vmem:[#allocation2 + $0x108] sm:$0xf]
        %v834 = vld [vmem:[#allocation2 + $0x10c] sm:$0xf]
        %v835 = vld [vmem:[#allocation2 + $0x110] sm:$0xf]
        %v836 = vld [vmem:[#allocation2 + $0x114] sm:$0xf]
        %v837 = vld [vmem:[#allocation4 + $0x60] sm:$0x1]
        %v838 = vperm.slane %v837, 0
        %v855 = vunpack.c.l.b16 %v821
        %v856 = vunpack.c.l.b16 %v822
        %v857 = vunpack.c.l.b16 %v823
        %v858 = vunpack.c.l.b16 %v824
        %v859 = vunpack.c.l.b16 %v825
        %v860 = vunpack.c.l.b16 %v826
        %v861 = vunpack.c.l.b16 %v827
        %v862 = vunpack.c.l.b16 %v828
        %v863 = vunpack.c.l.b16 %v829
        %v864 = vunpack.c.l.b16 %v830
        %v865 = vunpack.c.l.b16 %v831
        %v866 = vunpack.c.l.b16 %v832
        %v867 = vunpack.c.l.b16 %v833
        %v868 = vunpack.c.l.b16 %v834
        %v869 = vunpack.c.l.b16 %v835
        %v870 = vunpack.c.l.b16 %v836
        %v871 = vpack.c.b16 %v856, %v855
        %v872 = vpack.c.b16 %v858, %v857
        %v873 = vpack.c.b16 %v860, %v859
        %v874 = vpack.c.b16 %v862, %v861
        %v875 = vpack.c.b16 %v864, %v863
        %v876 = vpack.c.b16 %v866, %v865
        %v877 = vpack.c.b16 %v868, %v867
        %v878 = vpack.c.b16 %v870, %v869
        %887 = vmatpush.bf16.msra.mxu0 %v878
        %888 = vmatpush.bf16.msra.mxu0 %v877
        %889 = vmatpush.bf16.msra.mxu0 %v876
        %890 = vmatpush.bf16.msra.mxu0 %v875
        %891 = vmatpush.bf16.msra.mxu0 %v874
        %892 = vmatpush.bf16.msra.mxu0 %v873
        %893 = vmatpush.bf16.msra.mxu0 %v872
        %894 = vmatpush.bf16.msra.mxu0 %v871
        %895 = vmatmul.bf16.gmra.mxu0 %v820
        %v896 = vpop.f32.mrf.mxu0
        %v897 = vadd.f32 %v838, %v896
        %v898 = vpop.f32.mrf.mxu0
        %899 = vdwg.mxu0
        %v900 = vadd.f32 %v738, %v897
        %v901 = vld [vmem:[#allocation4 + $0x68] sm:$0x1]
        %v902 = vld [vmem:[#allocation4 + $0x70] sm:$0x1]
        %903 = vadd.xlane.f32.xlu0 %v900
        %v904 = vpop.xlane.xlu0 %903
        %v905 = vmul.f32 %v904, 0.03125
        %v906 = vmul.f32 %v900, %v900
        %907 = vadd.xlane.f32.xlu0 %v906
        %v908 = vpop.xlane.xlu0 %907
        %v909 = vmul.f32 %v908, 0.03125
        %v910 = vmul.f32 %v905, %v905
        %v911 = vsub.f32 %v909, %v910
        %v912 = vsub.f32 %v900, %v905
        %v913 = vadd.f32 %v911, 1e-05
        %v914 = vrsqrt.pop %v913
        %v915 = vmul.f32 %v914, %v913
        %v916 = vmul.f32 %v915, %v914
        %v917 = vmul.f32 0.5, %v916
        %v918 = vsub.f32 1.5, %v917
        %v919 = vmul.f32 %v914, %v918
        %vm920 = vweird.f32 %v913
        %vm921 = vweird.f32 %v914
        %vm922 = vmor %vm920, %vm921
        %v923 = vsel %vm922, %v914, %v919
        %v924 = vmul.f32 %v912, %v923
        %v925 = vperm.slane %v901, 0
        %v926 = vmul.f32 %v924, %v925
        %v927 = vperm.slane %v902, 0
        %v928 = vadd.f32 %v926, %v927
        %v929 = vpack.c.bf16 %v928, %v928
        %v930 = vld [vmem:[#allocation2 + $0x118] sm:$0xf]
        %v931 = vld [vmem:[#allocation2 + $0x11c] sm:$0xf]
        %v932 = vld [vmem:[#allocation2 + $0x120] sm:$0xf]
        %v933 = vld [vmem:[#allocation2 + $0x124] sm:$0xf]
        %v934 = vld [vmem:[#allocation2 + $0x128] sm:$0xf]
        %v935 = vld [vmem:[#allocation2 + $0x12c] sm:$0xf]
        %v936 = vld [vmem:[#allocation2 + $0x130] sm:$0xf]
        %v937 = vld [vmem:[#allocation2 + $0x134] sm:$0xf]
        %v938 = vld [vmem:[#allocation2 + $0x138] sm:$0xf]
        %v939 = vld [vmem:[#allocation2 + $0x13c] sm:$0xf]
        %v940 = vld [vmem:[#allocation2 + $0x140] sm:$0xf]
        %v941 = vld [vmem:[#allocation2 + $0x144] sm:$0xf]
        %v942 = vld [vmem:[#allocation2 + $0x148] sm:$0xf]
        %v943 = vld [vmem:[#allocation2 + $0x14c] sm:$0xf]
        %v944 = vld [vmem:[#allocation2 + $0x150] sm:$0xf]
        %v945 = vld [vmem:[#allocation2 + $0x154] sm:$0xf]
        %v946 = vld [vmem:[#allocation4 + $0x78] sm:$0x1]
        %v947 = vperm.slane %v946, 0
        %v964 = vunpack.c.l.b16 %v930
        %v965 = vunpack.c.l.b16 %v931
        %v966 = vunpack.c.l.b16 %v932
        %v967 = vunpack.c.l.b16 %v933
        %v968 = vunpack.c.l.b16 %v934
        %v969 = vunpack.c.l.b16 %v935
        %v970 = vunpack.c.l.b16 %v936
        %v971 = vunpack.c.l.b16 %v937
        %v972 = vunpack.c.l.b16 %v938
        %v973 = vunpack.c.l.b16 %v939
        %v974 = vunpack.c.l.b16 %v940
        %v975 = vunpack.c.l.b16 %v941
        %v976 = vunpack.c.l.b16 %v942
        %v977 = vunpack.c.l.b16 %v943
        %v978 = vunpack.c.l.b16 %v944
        %v979 = vunpack.c.l.b16 %v945
        %v980 = vpack.c.b16 %v965, %v964
        %v981 = vpack.c.b16 %v967, %v966
        %v982 = vpack.c.b16 %v969, %v968
        %v983 = vpack.c.b16 %v971, %v970
        %v984 = vpack.c.b16 %v973, %v972
        %v985 = vpack.c.b16 %v975, %v974
        %v986 = vpack.c.b16 %v977, %v976
        %v987 = vpack.c.b16 %v979, %v978
        %996 = vmatpush.bf16.msra.mxu0 %v987
        %997 = vmatpush.bf16.msra.mxu0 %v986
        %998 = vmatpush.bf16.msra.mxu0 %v985
        %999 = vmatpush.bf16.msra.mxu0 %v984
        %1000 = vmatpush.bf16.msra.mxu0 %v983
        %1001 = vmatpush.bf16.msra.mxu0 %v982
        %1002 = vmatpush.bf16.msra.mxu0 %v981
        %1003 = vmatpush.bf16.msra.mxu0 %v980
        %1004 = vmatmul.bf16.gmra.mxu0 %v929
        %v1005 = vpop.f32.mrf.mxu0
        %v1006 = vadd.f32 %v947, %v1005
        %v1007 = vpop.f32.mrf.mxu0
        %1008 = vdwg.mxu0
        %v1009 = vld [vmem:[#allocation2 + $0x158] sm:$0xf]
        %v1010 = vld [vmem:[#allocation2 + $0x15c] sm:$0xf]
        %v1011 = vld [vmem:[#allocation2 + $0x160] sm:$0xf]
        %v1012 = vld [vmem:[#allocation2 + $0x164] sm:$0xf]
        %1014 = vrot.lane.b32.xlu0 %v1006, 96
        %v1015 = vpop.permute.xlu0 %1014
        %v1016 = vsel %vm363, %v1006, 0
        %v1018 = vsel %vm363, %v1015, 0
        %1020 = vmatpush.xpose.msra.mxu0 0.0
        %1021 = vmatpush.xpose.msra.mxu0 0.0
        %1022 = vmatpush.xpose.msra.mxu0 0.0
        %1023 = vmatpush.xpose.msra.mxu0 0.0
        %1024 = vmatpush.xpose.msra.mxu0 0.0
        %1025 = vmatpush.xpose.msra.mxu0 0.0
        %1026 = vmatpush.xpose.msra.mxu0 0.0
        %1027 = vmatpush.xpose.msra.mxu0 0.0
        %1028 = vmatpush.xpose.msra.mxu0 0.0
        %1029 = vmatpush.xpose.msra.mxu0 0.0
        %1030 = vmatpush.xpose.msra.mxu0 0.0
        %1031 = vmatpush.xpose.msra.mxu0 0.0
        %1032 = vmatpush.xpose.msra.mxu0 0.0
        %1033 = vmatpush.xpose.msra.mxu0 0.0
        %1034 = vmatpush.xpose.msra.mxu0 0.0
        %1035 = vmatpush.xpose.msra.mxu0 %v1018
        %1036 = vmatmul.f32.gmra.mxu0 %v1016
        %v1037 = vpop.f32.mrf.mxu0
        %v1038 = vadd.f32 0.0, %v1037
        %1039 = vdwg.mxu0
        %v1040 = vmul.f32 %v1038, 0.35355338
        %v1041 = vsel %vm363, %v1040, -inf
        %1042 = vmax.xlane.f32.xlu0 %v1041
        %v1043 = vpop.xlane.xlu0 %1042
        %v1044 = vsub.f32 %v1040, %v1043
        %v1045 = vmul.f32 %v1044, 1.442695
        %v1046 = vpow.pop %v1045
        %v1047 = vsel %vm363, %v1046, 0.0
        %1048 = vadd.xlane.f32.xlu0 %v1047
        %v1049 = vpop.xlane.xlu0 %1048
        %v1050 = vrcp.pop %v1049
        %v1051 = vmul.f32 %v1046, %v1050
        %1052 = vrot.lane.b32.xlu0 %v1006, 64
        %v1053 = vpop.permute.xlu0 %1052
        %v1056 = vsel %vm363, %v1051, 0
        %1058 = vmatpush.msra.mxu0 0.0
        %1059 = vmatpush.msra.mxu0 0.0
        %1060 = vmatpush.msra.mxu0 0.0
        %1061 = vmatpush.msra.mxu0 0.0
        %1062 = vmatpush.msra.mxu0 0.0
        %1063 = vmatpush.msra.mxu0 0.0
        %1064 = vmatpush.msra.mxu0 0.0
        %1065 = vmatpush.msra.mxu0 0.0
        %1066 = vmatpush.msra.mxu0 0.0
        %1067 = vmatpush.msra.mxu0 0.0
        %1068 = vmatpush.msra.mxu0 0.0
        %1069 = vmatpush.msra.mxu0 0.0
        %1070 = vmatpush.msra.mxu0 0.0
        %1071 = vmatpush.msra.mxu0 0.0
        %1072 = vmatpush.msra.mxu0 0.0
        %1073 = vmatpush.msra.mxu0 %v1053
        %1074 = vmatmul.f32.gmra.mxu0 %v1056
        %v1075 = vpop.f32.mrf.mxu0
        %v1076 = vadd.f32 0.0, %v1075
        %1077 = vdwg.mxu0
        %v1078 = vpack.c.bf16 %v1076, %v1076
        %1079 = vrot.lane.b32.xlu0 %v1006, 120
        %v1080 = vpop.permute.xlu0 %1079
        %1081 = vrot.lane.b32.xlu0 %v1006, 88
        %v1082 = vpop.permute.xlu0 %1081
        %v1083 = vsel %vm363, %v1080, 0
        %v1085 = vsel %vm363, %v1082, 0
        %1087 = vmatpush.xpose.msra.mxu0 0.0
        %1088 = vmatpush.xpose.msra.mxu0 0.0
        %1089 = vmatpush.xpose.msra.mxu0 0.0
        %1090 = vmatpush.xpose.msra.mxu0 0.0
        %1091 = vmatpush.xpose.msra.mxu0 0.0
        %1092 = vmatpush.xpose.msra.mxu0 0.0
        %1093 = vmatpush.xpose.msra.mxu0 0.0
        %1094 = vmatpush.xpose.msra.mxu0 0.0
        %1095 = vmatpush.xpose.msra.mxu0 0.0
        %1096 = vmatpush.xpose.msra.mxu0 0.0
        %1097 = vmatpush.xpose.msra.mxu0 0.0
        %1098 = vmatpush.xpose.msra.mxu0 0.0
        %1099 = vmatpush.xpose.msra.mxu0 0.0
        %1100 = vmatpush.xpose.msra.mxu0 0.0
        %1101 = vmatpush.xpose.msra.mxu0 0.0
        %1102 = vmatpush.xpose.msra.mxu0 %v1085
        %1103 = vmatmul.f32.gmra.mxu0 %v1083
        %v1104 = vpop.f32.mrf.mxu0
        %v1105 = vadd.f32 0.0, %v1104
        %1106 = vdwg.mxu0
        %v1107 = vmul.f32 %v1105, 0.35355338
        %v1108 = vsel %vm363, %v1107, -inf
        %1109 = vmax.xlane.f32.xlu0 %v1108
        %v1110 = vpop.xlane.xlu0 %1109
        %v1111 = vsub.f32 %v1107, %v1110
        %v1112 = vmul.f32 %v1111, 1.442695
        %v1113 = vpow.pop %v1112
        %v1114 = vsel %vm363, %v1113, 0.0
        %1115 = vadd.xlane.f32.xlu0 %v1114
        %v1116 = vpop.xlane.xlu0 %1115
        %v1117 = vrcp.pop %v1116
        %v1118 = vmul.f32 %v1113, %v1117
        %1119 = vrot.lane.b32.xlu0 %v1006, 56
        %v1120 = vpop.permute.xlu0 %1119
        %v1123 = vsel %vm363, %v1118, 0
        %1125 = vmatpush.msra.mxu0 0.0
        %1126 = vmatpush.msra.mxu0 0.0
        %1127 = vmatpush.msra.mxu0 0.0
        %1128 = vmatpush.msra.mxu0 0.0
        %1129 = vmatpush.msra.mxu0 0.0
        %1130 = vmatpush.msra.mxu0 0.0
        %1131 = vmatpush.msra.mxu0 0.0
        %1132 = vmatpush.msra.mxu0 0.0
        %1133 = vmatpush.msra.mxu0 0.0
        %1134 = vmatpush.msra.mxu0 0.0
        %1135 = vmatpush.msra.mxu0 0.0
        %1136 = vmatpush.msra.mxu0 0.0
        %1137 = vmatpush.msra.mxu0 0.0
        %1138 = vmatpush.msra.mxu0 0.0
        %1139 = vmatpush.msra.mxu0 0.0
        %1140 = vmatpush.msra.mxu0 %v1120
        %1141 = vmatmul.f32.gmra.mxu0 %v1123
        %v1142 = vpop.f32.mrf.mxu0
        %v1143 = vadd.f32 0.0, %v1142
        %1144 = vdwg.mxu0
        %v1145 = vpack.c.bf16 %v1143, %v1143
        %v1147 = vsel %vm363, %v1145, 0
        %v1150 = vsel %vm497, %v1010, 0
        %1152 = vmatpush.bf16.msra.mxu0 0
        %1153 = vmatpush.bf16.msra.mxu0 0
        %1154 = vmatpush.bf16.msra.mxu0 0
        %1155 = vmatpush.bf16.msra.mxu0 0
        %1156 = vmatpush.bf16.msra.mxu0 0
        %1157 = vmatpush.bf16.msra.mxu0 0
        %1158 = vmatpush.bf16.msra.mxu0 0
        %1159 = vmatpush.bf16.msra.mxu0 %v1150
        %1160 = vmatmul.bf16.gmra.mxu0 %v1147
        %v1161 = vpop.f32.mrf.mxu0
        %v1162 = vadd.f32 0.0, %v1161
        %v1163 = vpop.f32.mrf.mxu0
        %1164 = vdwg.mxu0
        %v1166 = vsel %vm363, %v1078, 0
        %v1169 = vsel %vm497, %v1009, 0
        %1171 = vmatpush.bf16.msra.mxu0 0
        %1172 = vmatpush.bf16.msra.mxu0 0
        %1173 = vmatpush.bf16.msra.mxu0 0
        %1174 = vmatpush.bf16.msra.mxu0 0
        %1175 = vmatpush.bf16.msra.mxu0 0
        %1176 = vmatpush.bf16.msra.mxu0 0
        %1177 = vmatpush.bf16.msra.mxu0 0
        %1178 = vmatpush.bf16.msra.mxu0 %v1169
        %1179 = vmatmul.bf16.gmra.mxu0 %v1166
        %v1180 = vpop.f32.mrf.mxu0
        %v1181 = vadd.f32 %v1162, %v1180
        %v1182 = vpop.f32.mrf.mxu0
        %1183 = vdwg.mxu0
        %1184 = vrot.lane.b32.xlu0 %v1006, 112
        %v1185 = vpop.permute.xlu0 %1184
        %1186 = vrot.lane.b32.xlu0 %v1006, 80
        %v1187 = vpop.permute.xlu0 %1186
        %v1188 = vsel %vm363, %v1185, 0
        %v1190 = vsel %vm363, %v1187, 0
        %1192 = vmatpush.xpose.msra.mxu0 0.0
        %1193 = vmatpush.xpose.msra.mxu0 0.0
        %1194 = vmatpush.xpose.msra.mxu0 0.0
        %1195 = vmatpush.xpose.msra.mxu0 0.0
        %1196 = vmatpush.xpose.msra.mxu0 0.0
        %1197 = vmatpush.xpose.msra.mxu0 0.0
        %1198 = vmatpush.xpose.msra.mxu0 0.0
        %1199 = vmatpush.xpose.msra.mxu0 0.0
        %1200 = vmatpush.xpose.msra.mxu0 0.0
        %1201 = vmatpush.xpose.msra.mxu0 0.0
        %1202 = vmatpush.xpose.msra.mxu0 0.0
        %1203 = vmatpush.xpose.msra.mxu0 0.0
        %1204 = vmatpush.xpose.msra.mxu0 0.0
        %1205 = vmatpush.xpose.msra.mxu0 0.0
        %1206 = vmatpush.xpose.msra.mxu0 0.0
        %1207 = vmatpush.xpose.msra.mxu0 %v1190
        %1208 = vmatmul.f32.gmra.mxu0 %v1188
        %v1209 = vpop.f32.mrf.mxu0
        %v1210 = vadd.f32 0.0, %v1209
        %1211 = vdwg.mxu0
        %v1212 = vmul.f32 %v1210, 0.35355338
        %v1213 = vsel %vm363, %v1212, -inf
        %1214 = vmax.xlane.f32.xlu0 %v1213
        %v1215 = vpop.xlane.xlu0 %1214
        %v1216 = vsub.f32 %v1212, %v1215
        %v1217 = vmul.f32 %v1216, 1.442695
        %v1218 = vpow.pop %v1217
        %v1219 = vsel %vm363, %v1218, 0.0
        %1220 = vadd.xlane.f32.xlu0 %v1219
        %v1221 = vpop.xlane.xlu0 %1220
        %v1222 = vrcp.pop %v1221
        %v1223 = vmul.f32 %v1218, %v1222
        %1224 = vrot.lane.b32.xlu0 %v1006, 48
        %v1225 = vpop.permute.xlu0 %1224
        %v1228 = vsel %vm363, %v1223, 0
        %1230 = vmatpush.msra.mxu0 0.0
        %1231 = vmatpush.msra.mxu0 0.0
        %1232 = vmatpush.msra.mxu0 0.0
        %1233 = vmatpush.msra.mxu0 0.0
        %1234 = vmatpush.msra.mxu0 0.0
        %1235 = vmatpush.msra.mxu0 0.0
        %1236 = vmatpush.msra.mxu0 0.0
        %1237 = vmatpush.msra.mxu0 0.0
        %1238 = vmatpush.msra.mxu0 0.0
        %1239 = vmatpush.msra.mxu0 0.0
        %1240 = vmatpush.msra.mxu0 0.0
        %1241 = vmatpush.msra.mxu0 0.0
        %1242 = vmatpush.msra.mxu0 0.0
        %1243 = vmatpush.msra.mxu0 0.0
        %1244 = vmatpush.msra.mxu0 0.0
        %1245 = vmatpush.msra.mxu0 %v1225
        %1246 = vmatmul.f32.gmra.mxu0 %v1228
        %v1247 = vpop.f32.mrf.mxu0
        %v1248 = vadd.f32 0.0, %v1247
        %1249 = vdwg.mxu0
        %v1250 = vpack.c.bf16 %v1248, %v1248
        %v1252 = vsel %vm363, %v1250, 0
        %v1255 = vsel %vm497, %v1011, 0
        %1257 = vmatpush.bf16.msra.mxu0 0
        %1258 = vmatpush.bf16.msra.mxu0 0
        %1259 = vmatpush.bf16.msra.mxu0 0
        %1260 = vmatpush.bf16.msra.mxu0 0
        %1261 = vmatpush.bf16.msra.mxu0 0
        %1262 = vmatpush.bf16.msra.mxu0 0
        %1263 = vmatpush.bf16.msra.mxu0 0
        %1264 = vmatpush.bf16.msra.mxu0 %v1255
        %1265 = vmatmul.bf16.gmra.mxu0 %v1252
        %v1266 = vpop.f32.mrf.mxu0
        %v1267 = vadd.f32 0.0, %v1266
        %v1268 = vpop.f32.mrf.mxu0
        %1269 = vdwg.mxu0
        %v1270 = vadd.f32 %v1181, %v1267
        %1271 = vrot.lane.b32.xlu0 %v1006, 104
        %v1272 = vpop.permute.xlu0 %1271
        %1273 = vrot.lane.b32.xlu0 %v1006, 72
        %v1274 = vpop.permute.xlu0 %1273
        %v1275 = vsel %vm363, %v1272, 0
        %v1277 = vsel %vm363, %v1274, 0
        %1279 = vmatpush.xpose.msra.mxu0 0.0
        %1280 = vmatpush.xpose.msra.mxu0 0.0
        %1281 = vmatpush.xpose.msra.mxu0 0.0
        %1282 = vmatpush.xpose.msra.mxu0 0.0
        %1283 = vmatpush.xpose.msra.mxu0 0.0
        %1284 = vmatpush.xpose.msra.mxu0 0.0
        %1285 = vmatpush.xpose.msra.mxu0 0.0
        %1286 = vmatpush.xpose.msra.mxu0 0.0
        %1287 = vmatpush.xpose.msra.mxu0 0.0
        %1288 = vmatpush.xpose.msra.mxu0 0.0
        %1289 = vmatpush.xpose.msra.mxu0 0.0
        %1290 = vmatpush.xpose.msra.mxu0 0.0
        %1291 = vmatpush.xpose.msra.mxu0 0.0
        %1292 = vmatpush.xpose.msra.mxu0 0.0
        %1293 = vmatpush.xpose.msra.mxu0 0.0
        %1294 = vmatpush.xpose.msra.mxu0 %v1277
        %1295 = vmatmul.f32.gmra.mxu0 %v1275
        %v1296 = vpop.f32.mrf.mxu0
        %v1297 = vadd.f32 0.0, %v1296
        %1298 = vdwg.mxu0
        %v1299 = vmul.f32 %v1297, 0.35355338
        %v1300 = vsel %vm363, %v1299, -inf
        %1301 = vmax.xlane.f32.xlu0 %v1300
        %v1302 = vpop.xlane.xlu0 %1301
        %v1303 = vsub.f32 %v1299, %v1302
        %v1304 = vmul.f32 %v1303, 1.442695
        %v1305 = vpow.pop %v1304
        %v1306 = vsel %vm363, %v1305, 0.0
        %1307 = vadd.xlane.f32.xlu0 %v1306
        %v1308 = vpop.xlane.xlu0 %1307
        %v1309 = vrcp.pop %v1308
        %v1310 = vmul.f32 %v1305, %v1309
        %1311 = vrot.lane.b32.xlu0 %v1006, 40
        %v1312 = vpop.permute.xlu0 %1311
        %v1315 = vsel %vm363, %v1310, 0
        %1317 = vmatpush.msra.mxu0 0.0
        %1318 = vmatpush.msra.mxu0 0.0
        %1319 = vmatpush.msra.mxu0 0.0
        %1320 = vmatpush.msra.mxu0 0.0
        %1321 = vmatpush.msra.mxu0 0.0
        %1322 = vmatpush.msra.mxu0 0.0
        %1323 = vmatpush.msra.mxu0 0.0
        %1324 = vmatpush.msra.mxu0 0.0
        %1325 = vmatpush.msra.mxu0 0.0
        %1326 = vmatpush.msra.mxu0 0.0
        %1327 = vmatpush.msra.mxu0 0.0
        %1328 = vmatpush.msra.mxu0 0.0
        %1329 = vmatpush.msra.mxu0 0.0
        %1330 = vmatpush.msra.mxu0 0.0
        %1331 = vmatpush.msra.mxu0 0.0
        %1332 = vmatpush.msra.mxu0 %v1312
        %1333 = vmatmul.f32.gmra.mxu0 %v1315
        %v1334 = vpop.f32.mrf.mxu0
        %v1335 = vadd.f32 0.0, %v1334
        %1336 = vdwg.mxu0
        %v1337 = vpack.c.bf16 %v1335, %v1335
        %v1339 = vsel %vm363, %v1337, 0
        %v1342 = vsel %vm497, %v1012, 0
        %1344 = vmatpush.bf16.msra.mxu0 0
        %1345 = vmatpush.bf16.msra.mxu0 0
        %1346 = vmatpush.bf16.msra.mxu0 0
        %1347 = vmatpush.bf16.msra.mxu0 0
        %1348 = vmatpush.bf16.msra.mxu0 0
        %1349 = vmatpush.bf16.msra.mxu0 0
        %1350 = vmatpush.bf16.msra.mxu0 0
        %1351 = vmatpush.bf16.msra.mxu0 %v1342
        %1352 = vmatmul.bf16.gmra.mxu0 %v1339
        %v1353 = vpop.f32.mrf.mxu0
        %v1354 = vadd.f32 0.0, %v1353
        %v1355 = vpop.f32.mrf.mxu0
        %1356 = vdwg.mxu0
        %v1357 = vadd.f32 %v1270, %v1354
        %v1358 = vld [vmem:[#allocation4 + $0x80] sm:$0x1]
        %v1359 = vperm.slane %v1358, 0
        %v1360 = vadd.f32 %v1357, %v1359
        %v1361 = vadd.f32 %v928, %v1360
        %v1362 = vld [vmem:[#allocation4 + $0x88] sm:$0x1]
        %v1363 = vld [vmem:[#allocation4 + $0x90] sm:$0x1]
        %1364 = vadd.xlane.f32.xlu0 %v1361
        %v1365 = vpop.xlane.xlu0 %1364
        %v1366 = vmul.f32 %v1365, 0.03125
        %v1367 = vmul.f32 %v1361, %v1361
        %1368 = vadd.xlane.f32.xlu0 %v1367
        %v1369 = vpop.xlane.xlu0 %1368
        %v1370 = vmul.f32 %v1369, 0.03125
        %v1371 = vmul.f32 %v1366, %v1366
        %v1372 = vsub.f32 %v1370, %v1371
        %v1373 = vsub.f32 %v1361, %v1366
        %v1374 = vadd.f32 %v1372, 1e-05
        %v1375 = vrsqrt.pop %v1374
        %v1376 = vmul.f32 %v1375, %v1374
        %v1377 = vmul.f32 %v1376, %v1375
        %v1378 = vmul.f32 0.5, %v1377
        %v1379 = vsub.f32 1.5, %v1378
        %v1380 = vmul.f32 %v1375, %v1379
        %vm1381 = vweird.f32 %v1374
        %vm1382 = vweird.f32 %v1375
        %vm1383 = vmor %vm1381, %vm1382
        %v1384 = vsel %vm1383, %v1375, %v1380
        %v1385 = vmul.f32 %v1373, %v1384
        %v1386 = vperm.slane %v1362, 0
        %v1387 = vmul.f32 %v1385, %v1386
        %v1388 = vperm.slane %v1363, 0
        %v1389 = vadd.f32 %v1387, %v1388
        %v1390 = vpack.c.bf16 %v1389, %v1389
        %v1391 = vld [vmem:[#allocation2 + $0x168] sm:$0xf]
        %v1392 = vld [vmem:[#allocation2 + $0x16c] sm:$0xf]
        %v1393 = vld [vmem:[#allocation2 + $0x170] sm:$0xf]
        %v1394 = vld [vmem:[#allocation2 + $0x174] sm:$0xf]
        %v1395 = vld [vmem:[#allocation2 + $0x178] sm:$0xf]
        %v1396 = vld [vmem:[#allocation2 + $0x17c] sm:$0xf]
        %v1397 = vld [vmem:[#allocation2 + $0x180] sm:$0xf]
        %v1398 = vld [vmem:[#allocation2 + $0x184] sm:$0xf]
        %v1399 = vld [vmem:[#allocation2 + $0x188] sm:$0xf]
        %v1400 = vld [vmem:[#allocation2 + $0x18c] sm:$0xf]
        %v1401 = vld [vmem:[#allocation2 + $0x190] sm:$0xf]
        %v1402 = vld [vmem:[#allocation2 + $0x194] sm:$0xf]
        %v1403 = vld [vmem:[#allocation2 + $0x198] sm:$0xf]
        %v1404 = vld [vmem:[#allocation2 + $0x19c] sm:$0xf]
        %v1405 = vld [vmem:[#allocation2 + $0x1a0] sm:$0xf]
        %v1406 = vld [vmem:[#allocation2 + $0x1a4] sm:$0xf]
        %v1407 = vld [vmem:[#allocation4 + $0x98] sm:$0x1]
        %v1408 = vperm.slane %v1407, 0
        %v1425 = vunpack.c.l.b16 %v1391
        %v1426 = vunpack.c.l.b16 %v1392
        %v1427 = vunpack.c.l.b16 %v1393
        %v1428 = vunpack.c.l.b16 %v1394
        %v1429 = vunpack.c.l.b16 %v1395
        %v1430 = vunpack.c.l.b16 %v1396
        %v1431 = vunpack.c.l.b16 %v1397
        %v1432 = vunpack.c.l.b16 %v1398
        %v1433 = vunpack.c.l.b16 %v1399
        %v1434 = vunpack.c.l.b16 %v1400
        %v1435 = vunpack.c.l.b16 %v1401
        %v1436 = vunpack.c.l.b16 %v1402
        %v1437 = vunpack.c.l.b16 %v1403
        %v1438 = vunpack.c.l.b16 %v1404
        %v1439 = vunpack.c.l.b16 %v1405
        %v1440 = vunpack.c.l.b16 %v1406
        %v1441 = vpack.c.b16 %v1426, %v1425
        %v1442 = vpack.c.b16 %v1428, %v1427
        %v1443 = vpack.c.b16 %v1430, %v1429
        %v1444 = vpack.c.b16 %v1432, %v1431
        %v1445 = vpack.c.b16 %v1434, %v1433
        %v1446 = vpack.c.b16 %v1436, %v1435
        %v1447 = vpack.c.b16 %v1438, %v1437
        %v1448 = vpack.c.b16 %v1440, %v1439
        %1457 = vmatpush.bf16.msra.mxu0 %v1448
        %1458 = vmatpush.bf16.msra.mxu0 %v1447
        %1459 = vmatpush.bf16.msra.mxu0 %v1446
        %1460 = vmatpush.bf16.msra.mxu0 %v1445
        %1461 = vmatpush.bf16.msra.mxu0 %v1444
        %1462 = vmatpush.bf16.msra.mxu0 %v1443
        %1463 = vmatpush.bf16.msra.mxu0 %v1442
        %1464 = vmatpush.bf16.msra.mxu0 %v1441
        %1465 = vmatmul.bf16.gmra.mxu0 %v1390
        %v1466 = vpop.f32.mrf.mxu0
        %v1467 = vadd.f32 %v1408, %v1466
        %v1468 = vpop.f32.mrf.mxu0
        %1469 = vdwg.mxu0
        %v1470 = vmax.f32 %v1467, 0.0
        %v1471 = vpack.c.bf16 %v1470, %v1470
        %v1472 = vld [vmem:[#allocation2 + $0x1a8] sm:$0xf]
        %v1473 = vld [vmem:[#allocation2 + $0x1ac] sm:$0xf]
        %v1474 = vld [vmem:[#allocation2 + $0x1b0] sm:$0xf]
        %v1475 = vld [vmem:[#allocation2 + $0x1b4] sm:$0xf]
        %v1476 = vld [vmem:[#allocation2 + $0x1b8] sm:$0xf]
        %v1477 = vld [vmem:[#allocation2 + $0x1bc] sm:$0xf]
        %v1478 = vld [vmem:[#allocation2 + $0x1c0] sm:$0xf]
        %v1479 = vld [vmem:[#allocation2 + $0x1c4] sm:$0xf]
        %v1480 = vld [vmem:[#allocation2 + $0x1c8] sm:$0xf]
        %v1481 = vld [vmem:[#allocation2 + $0x1cc] sm:$0xf]
        %v1482 = vld [vmem:[#allocation2 + $0x1d0] sm:$0xf]
        %v1483 = vld [vmem:[#allocation2 + $0x1d4] sm:$0xf]
        %v1484 = vld [vmem:[#allocation2 + $0x1d8] sm:$0xf]
        %v1485 = vld [vmem:[#allocation2 + $0x1dc] sm:$0xf]
        %v1486 = vld [vmem:[#allocation2 + $0x1e0] sm:$0xf]
        %v1487 = vld [vmem:[#allocation2 + $0x1e4] sm:$0xf]
        %v1488 = vld [vmem:[#allocation4 + $0xa0] sm:$0x1]
        %v1489 = vperm.slane %v1488, 0
        %v1506 = vunpack.c.l.b16 %v1472
        %v1507 = vunpack.c.l.b16 %v1473
        %v1508 = vunpack.c.l.b16 %v1474
        %v1509 = vunpack.c.l.b16 %v1475
        %v1510 = vunpack.c.l.b16 %v1476
        %v1511 = vunpack.c.l.b16 %v1477
        %v1512 = vunpack.c.l.b16 %v1478
        %v1513 = vunpack.c.l.b16 %v1479
        %v1514 = vunpack.c.l.b16 %v1480
        %v1515 = vunpack.c.l.b16 %v1481
        %v1516 = vunpack.c.l.b16 %v1482
        %v1517 = vunpack.c.l.b16 %v1483
        %v1518 = vunpack.c.l.b16 %v1484
        %v1519 = vunpack.c.l.b16 %v1485
        %v1520 = vunpack.c.l.b16 %v1486
        %v1521 = vunpack.c.l.b16 %v1487
        %v1522 = vpack.c.b16 %v1507, %v1506
        %v1523 = vpack.c.b16 %v1509, %v1508
        %v1524 = vpack.c.b16 %v1511, %v1510
        %v1525 = vpack.c.b16 %v1513, %v1512
        %v1526 = vpack.c.b16 %v1515, %v1514
        %v1527 = vpack.c.b16 %v1517, %v1516
        %v1528 = vpack.c.b16 %v1519, %v1518
        %v1529 = vpack.c.b16 %v1521, %v1520
        %1538 = vmatpush.bf16.msra.mxu0 %v1529
        %1539 = vmatpush.bf16.msra.mxu0 %v1528
        %1540 = vmatpush.bf16.msra.mxu0 %v1527
        %1541 = vmatpush.bf16.msra.mxu0 %v1526
        %1542 = vmatpush.bf16.msra.mxu0 %v1525
        %1543 = vmatpush.bf16.msra.mxu0 %v1524
        %1544 = vmatpush.bf16.msra.mxu0 %v1523
        %1545 = vmatpush.bf16.msra.mxu0 %v1522
        %1546 = vmatmul.bf16.gmra.mxu0 %v1471
        %v1547 = vpop.f32.mrf.mxu0
        %v1548 = vadd.f32 %v1489, %v1547
        %v1549 = vpop.f32.mrf.mxu0
        %1550 = vdwg.mxu0
        %v1551 = vadd.f32 %v1389, %v1548
        %v1552 = vld [vmem:[#allocation4 + $0xa8] sm:$0x1]
        %v1553 = vld [vmem:[#allocation4 + $0xb0] sm:$0x1]
        %1554 = vadd.xlane.f32.xlu0 %v1551
        %v1555 = vpop.xlane.xlu0 %1554
        %v1556 = vmul.f32 %v1555, 0.03125
        %v1557 = vmul.f32 %v1551, %v1551
        %1558 = vadd.xlane.f32.xlu0 %v1557
        %v1559 = vpop.xlane.xlu0 %1558
        %v1560 = vmul.f32 %v1559, 0.03125
        %v1561 = vmul.f32 %v1556, %v1556
        %v1562 = vsub.f32 %v1560, %v1561
        %v1563 = vsub.f32 %v1551, %v1556
        %v1564 = vadd.f32 %v1562, 1e-05
        %v1565 = vrsqrt.pop %v1564
        %v1566 = vmul.f32 %v1565, %v1564
        %v1567 = vmul.f32 %v1566, %v1565
        %v1568 = vmul.f32 0.5, %v1567
        %v1569 = vsub.f32 1.5, %v1568
        %v1570 = vmul.f32 %v1565, %v1569
        %vm1571 = vweird.f32 %v1564
        %vm1572 = vweird.f32 %v1565
        %vm1573 = vmor %vm1571, %vm1572
        %v1574 = vsel %vm1573, %v1565, %v1570
        %v1575 = vmul.f32 %v1563, %v1574
        %v1576 = vperm.slane %v1552, 0
        %v1577 = vmul.f32 %v1575, %v1576
        %v1578 = vperm.slane %v1553, 0
        %v1579 = vadd.f32 %v1577, %v1578
        %v1580 = vld [vmem:[#allocation4 + $0x8] sm:$0x1]
        %v1581 = vld [vmem:[#allocation4 + $0x10] sm:$0x1]
        %1582 = vadd.xlane.f32.xlu0 %v1579
        %v1583 = vpop.xlane.xlu0 %1582
        %v1584 = vmul.f32 %v1583, 0.03125
        %v1585 = vmul.f32 %v1579, %v1579
        %1586 = vadd.xlane.f32.xlu0 %v1585
        %v1587 = vpop.xlane.xlu0 %1586
        %v1588 = vmul.f32 %v1587, 0.03125
        %v1589 = vmul.f32 %v1584, %v1584
        %v1590 = vsub.f32 %v1588, %v1589
        %v1591 = vsub.f32 %v1579, %v1584
        %v1592 = vadd.f32 %v1590, 1e-05
        %v1593 = vrsqrt.pop %v1592
        %v1594 = vmul.f32 %v1593, %v1592
        %v1595 = vmul.f32 %v1594, %v1593
        %v1596 = vmul.f32 0.5, %v1595
        %v1597 = vsub.f32 1.5, %v1596
        %v1598 = vmul.f32 %v1593, %v1597
        %vm1599 = vweird.f32 %v1592
        %vm1600 = vweird.f32 %v1593
        %vm1601 = vmor %vm1599, %vm1600
        %v1602 = vsel %vm1601, %v1593, %v1598
        %v1603 = vmul.f32 %v1591, %v1602
        %v1604 = vperm.slane %v1580, 0
        %v1605 = vmul.f32 %v1603, %v1604
        %v1606 = vperm.slane %v1581, 0
        %v1607 = vadd.f32 %v1605, %v1606
        %v1608 = vpack.c.bf16 %v1607, %v1607
        %v1609 = vld [vmem:[#allocation2 + $0x8] sm:$0xf]
        %v1610 = vld [vmem:[#allocation2 + $0xc] sm:$0xf]
        %v1611 = vld [vmem:[#allocation2 + $0x10] sm:$0xf]
        %v1612 = vld [vmem:[#allocation2 + $0x14] sm:$0xf]
        %v1613 = vld [vmem:[#allocation2 + $0x18] sm:$0xf]
        %v1614 = vld [vmem:[#allocation2 + $0x1c] sm:$0xf]
        %v1615 = vld [vmem:[#allocation2 + $0x20] sm:$0xf]
        %v1616 = vld [vmem:[#allocation2 + $0x24] sm:$0xf]
        %v1617 = vld [vmem:[#allocation2 + $0x28] sm:$0xf]
        %v1618 = vld [vmem:[#allocation2 + $0x2c] sm:$0xf]
        %v1619 = vld [vmem:[#allocation2 + $0x30] sm:$0xf]
        %v1620 = vld [vmem:[#allocation2 + $0x34] sm:$0xf]
        %v1621 = vld [vmem:[#allocation2 + $0x38] sm:$0xf]
        %v1622 = vld [vmem:[#allocation2 + $0x3c] sm:$0xf]
        %v1623 = vld [vmem:[#allocation2 + $0x40] sm:$0xf]
        %v1624 = vld [vmem:[#allocation2 + $0x44] sm:$0xf]
        %v1625 = vld [vmem:[#allocation4 + $0x18] sm:$0x1]
        %1627 = vset.pattern.permute.xlu0 0
        %1628 = vperm.xlu0 %1627, %v247
        %v1629 = vpop.permute.xlu0 %1628
        %v1631 = vperm.slane %v1625, 0
        %v1632 = vmul.f32 %v1629, %v1631
        %v1649 = vunpack.c.l.b16 %v1609
        %v1650 = vunpack.c.l.b16 %v1610
        %v1651 = vunpack.c.l.b16 %v1611
        %v1652 = vunpack.c.l.b16 %v1612
        %v1653 = vunpack.c.l.b16 %v1613
        %v1654 = vunpack.c.l.b16 %v1614
        %v1655 = vunpack.c.l.b16 %v1615
        %v1656 = vunpack.c.l.b16 %v1616
        %v1657 = vunpack.c.l.b16 %v1617
        %v1658 = vunpack.c.l.b16 %v1618
        %v1659 = vunpack.c.l.b16 %v1619
        %v1660 = vunpack.c.l.b16 %v1620
        %v1661 = vunpack.c.l.b16 %v1621
        %v1662 = vunpack.c.l.b16 %v1622
        %v1663 = vunpack.c.l.b16 %v1623
        %v1664 = vunpack.c.l.b16 %v1624
        %v1665 = vpack.c.b16 %v1650, %v1649
        %v1666 = vpack.c.b16 %v1652, %v1651
        %v1667 = vpack.c.b16 %v1654, %v1653
        %v1668 = vpack.c.b16 %v1656, %v1655
        %v1669 = vpack.c.b16 %v1658, %v1657
        %v1670 = vpack.c.b16 %v1660, %v1659
        %v1671 = vpack.c.b16 %v1662, %v1661
        %v1672 = vpack.c.b16 %v1664, %v1663
        %1681 = vmatpush.bf16.msra.mxu0 %v1672
        %1682 = vmatpush.bf16.msra.mxu0 %v1671
        %1683 = vmatpush.bf16.msra.mxu0 %v1670
        %1684 = vmatpush.bf16.msra.mxu0 %v1669
        %1685 = vmatpush.bf16.msra.mxu0 %v1668
        %1686 = vmatpush.bf16.msra.mxu0 %v1667
        %1687 = vmatpush.bf16.msra.mxu0 %v1666
        %1688 = vmatpush.bf16.msra.mxu0 %v1665
        %1689 = vmatmul.bf16.gmra.mxu0 %v1608
        %v1690 = vpop.f32.mrf.mxu0
        %v1691 = vadd.f32 %v1632, %v1690
        %v1692 = vpop.f32.mrf.mxu0
        %1693 = vdwg.mxu0
        %v1694 = vld [vmem:[#allocation4 + $0x20] sm:$0x1]
        %v1695 = vperm.slane %v1694, 0
        %v1696 = vadd.f32 %v1691, %v1695
        %v1697 = vmax.f32 %v1696, 0.0
        %v1698 = vld [vmem:[#allocation4 + $0x28] sm:$0x1]
        %v1699 = vperm.slane %v1698, 0
        %v1700 = vmul.f32 %v1697, %v1699
        %1701 = vadd.xlane.f32.xlu0 %v1700
        %v1702 = vpop.xlane.xlu0 %1701
        %v1703 = vld [vmem:[#allocation4 + $0x30] sm:$0x1]
        %v1704 = vperm.slane %v1703, 0
        %v1705 = vadd.f32 %v1702, %v1704
        %vm1706 = vcmask 7168
        %1707 = vst.msk [vmem:[%s243] sm:$0xff] %vm1706, %v1705
        %p1708 = scmp.lt.s32.totalorder %s17, 3
        %s1709 = scalar_select %p1708, %s17, 3
        %s1710 = smul.addr %s1709, 8
        %s1711 = scalar_lea.vmem %s4, %s1710
        // Predicated region
        $region45: #{tpu_custom_call.1} parent=35 // pred_check
          %p1712 = pneg %p129
        $region46: #{tpu_custom_call.1} parent=35 // pred_check_branch
          %1714 = sbr.rel (%p1712) target = $region48
        $region47: #{tpu_custom_call.1} parent=35 // pred_region
          _
        $region48: #{tpu_custom_call.1} parent=35 // pred_fallthru
          _
      $region36: #{tpu_custom_call.1} parent=5 // pred_fallthru
        _
      %p1715 = scmp.le.s32.totalorder 2, %s12
      // Predicated region
      $region49: #{tpu_custom_call.1} parent=5 // pred_check
        %p1716 = pneg %p1715
      $region50: #{tpu_custom_call.1} parent=5 // pred_check_branch
        %1718 = sbr.rel (%p1716) target = $region52
      $region51: #{tpu_custom_call.1} parent=5 // pred_region
        %s1719 = ssub.s32 %s12, 2
        // Predicated region
        $region53: #{tpu_custom_call.1} parent=51 // pred_check
          %p1720 = pneg %p135
        $region54: #{tpu_custom_call.1} parent=51 // pred_check_branch
          %1722 = sbr.rel (%p1720) target = $region56
        $region55: #{tpu_custom_call.1} parent=51 // pred_region
          %p1723 = scmp.lt.s32.totalorder %s18, 3
          %s1724 = scalar_select %p1723, %s18, 3
          %s1725 = smul.addr %s1724, 8
          %s1726 = scalar_lea.vmem %s4, %s1725
        $region56: #{tpu_custom_call.1} parent=51 // pred_fallthru
          _
      $region52: #{tpu_custom_call.1} parent=5 // pred_fallthru
        _
    $region6: #{tpu_custom_call.1} parent=1 // loop_footer
      %s16 = sadd.s32 1, %s12
    $region7: #{tpu_custom_call.1} parent=1 // loop_footer_branch
      %11 = sbr.rel target = $region3
    $region8: #{tpu_custom_call.1} parent=1 // loop_exit
      _
    %1727 = vsyncpa [#allocation3], 1
    %s1728 = scalar_lea.sflag [#allocation3], 1
    %1729 = vsyncpa %s1728, 1
    %1730 = vsyncpa [#allocation5], 1

</llo_original>
